<compile_context>
chip_gen: v5e
topology: v5e:2x2
jax: 0.10.0
libtpu: 0.0.40
codegen_flags: <defaults>
</compile_context>

<pallas_src>
import jax
import jax.numpy as jnp
from jax import lax
from jax.experimental import pallas as pl
from jax.experimental.pallas import tpu as pltpu

NUM_CLASSES = 10  # ListOps output classes


def _listops_kernel(x_ref, arcs_ref, len_ref, inv_len_ref,
                    w_arc_ref, w_cs_ref, b_comp_ref, w_dec_ref, b_dec_ref,
                    pred_ref, sample_ref):
    x = x_ref[...]                                    # (TB, S, D) f32
    arcs = arcs_ref[...]                              # (TB, S, S) f32
    TB, S, D = x.shape

    lengths = len_ref[...]                            # (TB, 1) int32
    inv_len = inv_len_ref[...]                        # (TB, 1) f32 (1 / max(len, 1))
    len3 = lengths.reshape(TB, 1, 1)

    x2d = x.reshape(TB * S, D)

    # ---------- archer: bilinear arc scoring (1/tau already folded into w_arc) ----------
    xa = jnp.dot(x2d, w_arc_ref[...],
                 preferred_element_type=jnp.float32).reshape(TB, S, D)
    z = jnp.einsum('bsd,btd->bst', xa, x,
                   preferred_element_type=jnp.float32)          # (TB, S, S)

    col = lax.broadcasted_iota(jnp.int32, (TB, S, S), 2)
    valid = jnp.logical_and(col < len3, arcs > 0.0)
    z = jnp.where(valid, z, jnp.float32(-1e9))

    # ---------- sampler: temperature softmax over head positions ----------
    # TODO(synk): training-mode Gumbel noise / straight-through hard sampling is
    # omitted to keep the kernel deterministic; eval-style soft sample only.
    m = jnp.max(z, axis=-1, keepdims=True)
    e = jnp.exp(z - m)
    denom = jnp.sum(e, axis=-1, keepdims=True)
    p = e * pl.reciprocal(denom, approx=False)                  # exact -> rows sum to 1
    sample_ref[...] = p.astype(sample_ref.dtype)

    # ---------- computer: one round of soft message passing + masked mean pool ----------
    msg = jnp.einsum('bst,btd->bsd', p, x,
                     preferred_element_type=jnp.float32)        # (TB, S, D)
    cat = jnp.concatenate([msg.reshape(TB * S, D), x2d], axis=-1)   # (TB*S, 2D)
    h = jnp.dot(cat, w_cs_ref[...], preferred_element_type=jnp.float32)
    h = jnp.maximum(h + b_comp_ref[...], 0.0).reshape(TB, S, D)

    row = lax.broadcasted_iota(jnp.int32, (TB, S, 1), 1)
    row_mask = (row < len3).astype(jnp.float32)                 # (TB, S, 1)
    comp = jnp.sum(h * row_mask, axis=1) * inv_len              # (TB, D)

    # ---------- decoder: linear classifier (lane-padded to 128 classes) ----------
    pred = jnp.dot(comp, w_dec_ref[...], preferred_element_type=jnp.float32)
    pred_ref[...] = (pred + b_dec_ref[...]).astype(pred_ref.dtype)


def listops_forward(x, arcs, lengths, params, tau, batch_tile=16):
    """Returns (pred [B, C], sample [B, S, S])."""
    B, S, D = x.shape
    C = params["w_dec"].shape[1]
    C_pad = pl.cdiv(C, 128) * 128                      # lane-dense pred output

    # Choose a batch tile compatible with the (8, 128) layout rules.
    if B <= batch_tile:
        tb = B
    else:
        tb = max(8, (batch_tile // 8) * 8)
    B_pad = pl.cdiv(B, tb) * tb
    if B_pad != B:
        pad = B_pad - B
        x = jnp.pad(x, ((0, pad), (0, 0), (0, 0)))
        arcs = jnp.pad(arcs, ((0, pad), (0, 0), (0, 0)))
        lengths = jnp.pad(lengths, ((0, pad),), constant_values=1)

    len_i32 = lengths.astype(jnp.int32).reshape(B_pad, 1)
    inv_len = (1.0 / jnp.maximum(lengths.astype(jnp.float32), 1.0)).reshape(B_pad, 1)

    w_arc = params["w_arc"] * jnp.float32(1.0 / tau)            # fold temperature
    w_cs = jnp.concatenate([params["w_comp"], params["w_self"]], axis=0)  # (2D, D)
    b_comp = params["b_comp"]
    w_dec = jnp.pad(params["w_dec"], ((0, 0), (0, C_pad - C)))
    b_dec = jnp.pad(params["b_dec"], ((0, 0), (0, C_pad - C)))

    grid = (B_pad // tb,)

    flops = int(B_pad) * (2 * S * D * D                # archer matmul
                          + 2 * S * S * D              # bilinear scorer
                          + 2 * S * S * D              # message passing
                          + 2 * S * (2 * D) * D        # fused computer matmul
                          + 2 * D * C_pad)             # decoder
    transcendentals = int(B_pad) * S * S
    bytes_accessed = 4 * int(
        B_pad * S * D + B_pad * S * S + 2 * B_pad          # x, arcs, lengths
        + D * D + 2 * D * D + D + D * C_pad + C_pad         # parameters
        + B_pad * C_pad + B_pad * S * S)                     # outputs

    grid_spec = pltpu.PrefetchScalarGridSpec(
        num_scalar_prefetch=0,
        grid=grid,
        in_specs=[
            pl.BlockSpec((tb, S, D), lambda b: (b, 0, 0)),      # x
            pl.BlockSpec((tb, S, S), lambda b: (b, 0, 0)),      # arcs
            pl.BlockSpec((tb, 1), lambda b: (b, 0)),            # lengths (int32)
            pl.BlockSpec((tb, 1), lambda b: (b, 0)),            # 1/length
            pl.BlockSpec((D, D), lambda b: (0, 0)),             # w_arc * (1/tau)
            pl.BlockSpec((2 * D, D), lambda b: (0, 0)),         # [w_comp; w_self]
            pl.BlockSpec((1, D), lambda b: (0, 0)),             # b_comp
            pl.BlockSpec((D, C_pad), lambda b: (0, 0)),         # w_dec (lane-padded)
            pl.BlockSpec((1, C_pad), lambda b: (0, 0)),         # b_dec (lane-padded)
        ],
        out_specs=[
            pl.BlockSpec((tb, C_pad), lambda b: (b, 0)),        # pred (lane-dense)
            pl.BlockSpec((tb, S, S), lambda b: (b, 0, 0)),      # sample
        ],
    )

    pred_pad, sample = pl.pallas_call(
        _listops_kernel,
        grid_spec=grid_spec,
        out_shape=(
            jax.ShapeDtypeStruct((B_pad, C_pad), jnp.float32),
            jax.ShapeDtypeStruct((B_pad, S, S), jnp.float32),
        ),
        compiler_params=pltpu.CompilerParams(
            dimension_semantics=("parallel",)),
        cost_estimate=pl.CostEstimate(
            flops=flops,
            transcendentals=transcendentals,
            bytes_accessed=bytes_accessed),
    )(x, arcs, len_i32, inv_len, w_arc, w_cs, b_comp, w_dec, b_dec)

    return pred_pad[:B, :C], sample[:B]


def init_params(key, D, C):
    ks = jax.random.split(key, 5)
    scale = 0.1
    return {
        "w_arc":  scale * jax.random.normal(ks[0], (D, D), jnp.float32),
        "w_comp": scale * jax.random.normal(ks[1], (D, D), jnp.float32),
        "w_self": scale * jax.random.normal(ks[2], (D, D), jnp.float32),
        "b_comp": jnp.zeros((1, D), jnp.float32),
        "w_dec":  scale * jax.random.normal(ks[3], (D, C), jnp.float32),
        "b_dec":  jnp.zeros((1, C), jnp.float32),
    }


def _reference_forward(x, arcs, lengths, params, tau):
    """Pure-JAX reference of the same forward (f32-accurate matmuls)."""
    hp = lax.Precision.HIGHEST
    B, S, D = x.shape
    xa = jnp.einsum('bsd,de->bse', x, params["w_arc"], precision=hp)
    logits = jnp.einsum('bse,bte->bst', xa, x, precision=hp)
    col = jnp.arange(S)[None, None, :]
    valid = jnp.logical_and(col < lengths[:, None, None], arcs > 0.0)
    logits = jnp.where(valid, logits, -1e9)
    p = jax.nn.softmax(logits / tau, axis=-1)
    msg = jnp.einsum('bst,btd->bsd', p, x, precision=hp)
    h = (jnp.einsum('bsd,de->bse', msg, params["w_comp"], precision=hp)
         + jnp.einsum('bsd,de->bse', x, params["w_self"], precision=hp)
         + params["b_comp"])
    h = jnp.maximum(h, 0.0)
    row_mask = (jnp.arange(S)[None, :, None] < lengths[:, None, None]).astype(jnp.float32)
    comp = jnp.sum(h * row_mask, axis=1) / jnp.maximum(
        lengths.astype(jnp.float32), 1.0)[:, None]
    pred = jnp.dot(comp, params["w_dec"], precision=hp) + params["b_dec"]
    return pred, p


if __name__ == "__main__":
    B, S, D, C = 32, 8, 32, NUM_CLASSES   # TB=16 -> grid of 2, M = TB*S = 128
    tau = 0.5

    key = jax.random.PRNGKey(0)
    kx, ka, kl, kp = jax.random.split(key, 4)

    x = jax.random.normal(kx, (B, S, D), jnp.float32)
    # allowed-arc mask: random, but always allow self-arcs so no in-length row is empty
    arcs = jnp.maximum(
        jax.random.bernoulli(ka, 0.6, (B, S, S)).astype(jnp.float32),
        jnp.eye(S, dtype=jnp.float32)[None, :, :],
    )
    lengths = jax.random.randint(kl, (B,), 1, S + 1).astype(jnp.int32)

    params = init_params(kp, D, C)

    pred, sample = listops_forward(x, arcs, lengths, params, tau, batch_tile=16)
    pred, sample = jax.block_until_ready((pred, sample))

    ref_pred, ref_sample = _reference_forward(x, arcs, lengths, params, tau)

    assert pred.shape == (B, C)
    assert sample.shape == (B, S, S)
    assert bool(jnp.all(jnp.isfinite(pred)))
    # softmax rows of the sample must sum to 1 (exact reciprocal kept in-kernel)
    assert bool(jnp.allclose(jnp.sum(sample, axis=-1), 1.0, atol=1e-4))
    # agreement with the pure-JAX reference
    assert bool(jnp.allclose(sample, ref_sample, atol=1e-3))
    assert bool(jnp.allclose(pred, ref_pred, atol=1e-2, rtol=1e-2))

    print("KERNEL_OK")
</pallas_src>

<mosaic_0001>
module attributes {stable_mosaic.version = 11 : i64} {
  func.func @_listops_kernel(%arg0: i32, %arg1: memref<16x8x32xf32, #tpu.memory_space<vmem>>, %arg2: memref<16x8x8xf32, #tpu.memory_space<vmem>>, %arg3: memref<16x1xi32, #tpu.memory_space<vmem>>, %arg4: memref<16x1xf32, #tpu.memory_space<vmem>>, %arg5: memref<32x32xf32, #tpu.memory_space<vmem>>, %arg6: memref<64x32xf32, #tpu.memory_space<vmem>>, %arg7: memref<1x32xf32, #tpu.memory_space<vmem>>, %arg8: memref<32x128xf32, #tpu.memory_space<vmem>>, %arg9: memref<1x128xf32, #tpu.memory_space<vmem>>, %arg10: memref<16x128xf32, #tpu.memory_space<vmem>>, %arg11: memref<16x8x8xf32, #tpu.memory_space<vmem>>) attributes {dimension_semantics = [#tpu.dimension_semantics<parallel>], iteration_bounds = array<i64: 2>, scalar_prefetch = 0 : i64, scratch_operands = 0 : i64, tpu.core_type = #tpu.core_type<tc>, window_params = [{transform_indices = @transform_0, window_bounds = array<i64: 16, 8, 32>}, {transform_indices = @transform_1, window_bounds = array<i64: 16, 8, 8>}, {transform_indices = @transform_2, window_bounds = array<i64: 16, 1>}, {transform_indices = @transform_3, window_bounds = array<i64: 16, 1>}, {pipeline_mode = #tpu.pipeline_mode<synchronous>, transform_indices = @transform_4, window_bounds = array<i64: 32, 32>}, {pipeline_mode = #tpu.pipeline_mode<synchronous>, transform_indices = @transform_5, window_bounds = array<i64: 64, 32>}, {pipeline_mode = #tpu.pipeline_mode<synchronous>, transform_indices = @transform_6, window_bounds = array<i64: 1, 32>}, {pipeline_mode = #tpu.pipeline_mode<synchronous>, transform_indices = @transform_7, window_bounds = array<i64: 32, 128>}, {pipeline_mode = #tpu.pipeline_mode<synchronous>, transform_indices = @transform_8, window_bounds = array<i64: 1, 128>}, {transform_indices = @transform_9, window_bounds = array<i64: 16, 128>}, {transform_indices = @transform_10, window_bounds = array<i64: 16, 8, 8>}]} {
    %c0 = arith.constant 0 : index
    %c0_0 = arith.constant 0 : index
    %c0_1 = arith.constant 0 : index
    %0 = vector.load %arg1[%c0, %c0_0, %c0_1] : memref<16x8x32xf32, #tpu.memory_space<vmem>>, vector<16x8x32xf32>
    %c0_2 = arith.constant 0 : index
    %c0_3 = arith.constant 0 : index
    %c0_4 = arith.constant 0 : index
    %1 = vector.load %arg2[%c0_2, %c0_3, %c0_4] : memref<16x8x8xf32, #tpu.memory_space<vmem>>, vector<16x8x8xf32>
    %c0_5 = arith.constant 0 : index
    %c0_6 = arith.constant 0 : index
    %2 = vector.load %arg3[%c0_5, %c0_6] : memref<16x1xi32, #tpu.memory_space<vmem>>, vector<16x1xi32>
    %c0_7 = arith.constant 0 : index
    %c0_8 = arith.constant 0 : index
    %3 = vector.load %arg4[%c0_7, %c0_8] : memref<16x1xf32, #tpu.memory_space<vmem>>, vector<16x1xf32>
    %4 = vector.shape_cast %2 : vector<16x1xi32> to vector<16x1x1xi32>
    %5 = vector.shape_cast %0 : vector<16x8x32xf32> to vector<128x32xf32>
    %c0_9 = arith.constant 0 : index
    %c0_10 = arith.constant 0 : index
    %6 = vector.load %arg5[%c0_9, %c0_10] : memref<32x32xf32, #tpu.memory_space<vmem>>, vector<32x32xf32>
    %cst = arith.constant dense<0.000000e+00> : vector<128x32xf32>
    %7 = tpu.matmul %5, %6, %cst {dimension_numbers = #tpu.dot_dimension_numbers<[1], [0], [0], [1], [0, 0, 1, 1], [], []>} : vector<128x32xf32>, vector<32x32xf32>, vector<128x32xf32> -> vector<128x32xf32>
    %8 = vector.shape_cast %7 : vector<128x32xf32> to vector<16x8x32xf32>
    "tpu.trace_start"() <{level = 10 : i32, message = "bsd,btd->bst"}> : () -> ()
    %cst_11 = arith.constant dense<0.000000e+00> : vector<16x8x8xf32>
    %9 = tpu.matmul %8, %0, %cst_11 {dimension_numbers = #tpu.dot_dimension_numbers<[2], [2], [1], [1], [0, 0, 0, 1, 1, 1], [0], [0]>} : vector<16x8x32xf32>, vector<16x8x32xf32>, vector<16x8x8xf32> -> vector<16x8x8xf32>
    "tpu.trace_stop"() : () -> ()
    %10 = tpu.iota {dimensions = array<i32: 2>} : vector<16x8x8xi32>
    %11 = vector.broadcast %4 : vector<16x1x1xi32> to vector<16x8x8xi32>
    %12 = arith.cmpi slt, %10, %11 : vector<16x8x8xi32>
    %cst_12 = arith.constant 0.000000e+00 : f32
    %13 = vector.broadcast %cst_12 : f32 to vector<16x8x8xf32>
    %14 = arith.cmpf ogt, %1, %13 : vector<16x8x8xf32>
    %15 = arith.andi %12, %14 : vector<16x8x8xi1>
    %cst_13 = arith.constant -1.000000e+09 : f32
    %16 = vector.broadcast %cst_13 : f32 to vector<16x8x8xf32>
    %17 = arith.select %15, %9, %16 : vector<16x8x8xi1>, vector<16x8x8xf32>
    %cst_14 = arith.constant dense<0xFF800000> : vector<16x8xf32>
    %18 = vector.multi_reduction <maximumf>, %17, %cst_14 [2] : vector<16x8x8xf32> to vector<16x8xf32>
    %19 = vector.shape_cast %18 : vector<16x8xf32> to vector<16x8x1xf32>
    %20 = vector.broadcast %19 : vector<16x8x1xf32> to vector<16x8x8xf32>
    %21 = arith.subf %17, %20 : vector<16x8x8xf32>
    %22 = math.exp %21 : vector<16x8x8xf32>
    %cst_15 = arith.constant dense<0.000000e+00> : vector<16x8xf32>
    %23 = vector.multi_reduction <add>, %22, %cst_15 [2] : vector<16x8x8xf32> to vector<16x8xf32>
    %24 = vector.shape_cast %23 : vector<16x8xf32> to vector<16x8x1xf32>
    %25 = tpu.reciprocal %24 : vector<16x8x1xf32> -> vector<16x8x1xf32>
    %26 = vector.broadcast %25 : vector<16x8x1xf32> to vector<16x8x8xf32>
    %27 = arith.mulf %22, %26 : vector<16x8x8xf32>
    %c0_16 = arith.constant 0 : index
    %c0_17 = arith.constant 0 : index
    %c0_18 = arith.constant 0 : index
    %28 = vector.load %arg11[%c0_16, %c0_17, %c0_18] : memref<16x8x8xf32, #tpu.memory_space<vmem>>, vector<16x8x8xf32>
    tpu.vector_store %arg11[%c0_16, %c0_17, %c0_18], %27 {strides = array<i32>} : memref<16x8x8xf32, #tpu.memory_space<vmem>>, vector<16x8x8xf32>,
    "tpu.trace_start"() <{level = 10 : i32, message = "bst,btd->bsd"}> : () -> ()
    %cst_19 = arith.constant dense<0.000000e+00> : vector<16x8x32xf32>
    %29 = tpu.matmul %27, %0, %cst_19 {dimension_numbers = #tpu.dot_dimension_numbers<[2], [1], [1], [2], [0, 0, 0, 1, 1, 2], [0], [0]>} : vector<16x8x8xf32>, vector<16x8x32xf32>, vector<16x8x32xf32> -> vector<16x8x32xf32>
    "tpu.trace_stop"() : () -> ()
    %30 = vector.shape_cast %29 : vector<16x8x32xf32> to vector<128x32xf32>
    %31 = tpu.concatenate %30, %5 in 1 : vector<128x32xf32>, vector<128x32xf32> -> vector<128x64xf32>
    %c0_20 = arith.constant 0 : index
    %c0_21 = arith.constant 0 : index
    %32 = vector.load %arg6[%c0_20, %c0_21] : memref<64x32xf32, #tpu.memory_space<vmem>>, vector<64x32xf32>
    %cst_22 = arith.constant dense<0.000000e+00> : vector<128x32xf32>
    %33 = tpu.matmul %31, %32, %cst_22 {dimension_numbers = #tpu.dot_dimension_numbers<[1], [0], [0], [1], [0, 0, 1, 1], [], []>} : vector<128x64xf32>, vector<64x32xf32>, vector<128x32xf32> -> vector<128x32xf32>
    %c0_23 = arith.constant 0 : index
    %c0_24 = arith.constant 0 : index
    %34 = vector.load %arg7[%c0_23, %c0_24] : memref<1x32xf32, #tpu.memory_space<vmem>>, vector<1x32xf32>
    %35 = vector.broadcast %34 : vector<1x32xf32> to vector<128x32xf32>
    %36 = arith.addf %33, %35 : vector<128x32xf32>
    %cst_25 = arith.constant 0.000000e+00 : f32
    %37 = vector.broadcast %cst_25 : f32 to vector<128x32xf32>
    %38 = arith.maximumf %36, %37 : vector<128x32xf32>
    %39 = vector.shape_cast %38 : vector<128x32xf32> to vector<16x8x32xf32>
    %40 = tpu.iota {dimensions = array<i32: 1>} : vector<16x8x1xi32>
    %41 = vector.broadcast %4 : vector<16x1x1xi32> to vector<16x8x1xi32>
    %42 = arith.cmpi slt, %40, %41 : vector<16x8x1xi32>
    %43 = arith.extui %42 : vector<16x8x1xi1> to vector<16x8x1xi32>
    %44 = arith.sitofp %43 : vector<16x8x1xi32> to vector<16x8x1xf32>
    %45 = vector.broadcast %44 : vector<16x8x1xf32> to vector<16x8x32xf32>
    %46 = arith.mulf %39, %45 : vector<16x8x32xf32>
    %cst_26 = arith.constant dense<0.000000e+00> : vector<16x32xf32>
    %47 = vector.multi_reduction <add>, %46, %cst_26 [1] : vector<16x8x32xf32> to vector<16x32xf32>
    %48 = vector.broadcast %3 : vector<16x1xf32> to vector<16x32xf32>
    %49 = arith.mulf %47, %48 : vector<16x32xf32>
    %c0_27 = arith.constant 0 : index
    %c0_28 = arith.constant 0 : index
    %50 = vector.load %arg8[%c0_27, %c0_28] : memref<32x128xf32, #tpu.memory_space<vmem>>, vector<32x128xf32>
    %cst_29 = arith.constant dense<0.000000e+00> : vector<16x128xf32>
    %51 = tpu.matmul %49, %50, %cst_29 {dimension_numbers = #tpu.dot_dimension_numbers<[1], [0], [0], [1], [0, 0, 1, 1], [], []>} : vector<16x32xf32>, vector<32x128xf32>, vector<16x128xf32> -> vector<16x128xf32>
    %c0_30 = arith.constant 0 : index
    %c0_31 = arith.constant 0 : index
    %52 = vector.load %arg9[%c0_30, %c0_31] : memref<1x128xf32, #tpu.memory_space<vmem>>, vector<1x128xf32>
    %53 = vector.broadcast %52 : vector<1x128xf32> to vector<16x128xf32>
    %54 = arith.addf %51, %53 : vector<16x128xf32>
    %c0_32 = arith.constant 0 : index
    %c0_33 = arith.constant 0 : index
    %55 = vector.load %arg10[%c0_32, %c0_33] : memref<16x128xf32, #tpu.memory_space<vmem>>, vector<16x128xf32>
    tpu.vector_store %arg10[%c0_32, %c0_33], %54 {strides = array<i32>} : memref<16x128xf32, #tpu.memory_space<vmem>>, vector<16x128xf32>,
    return
  }
  func.func @transform_0(%arg0: i32) -> (i32, i32, i32) {
    %c0_i32 = arith.constant 0 : i32
    %c0_i32_0 = arith.constant 0 : i32
    %c0_i32_1 = arith.constant 0 : i32
    return %arg0, %c0_i32, %c0_i32_0 : i32, i32, i32
  }
  func.func @transform_1(%arg0: i32) -> (i32, i32, i32) {
    %c0_i32 = arith.constant 0 : i32
    %c0_i32_0 = arith.constant 0 : i32
    %c0_i32_1 = arith.constant 0 : i32
    return %arg0, %c0_i32, %c0_i32_0 : i32, i32, i32
  }
  func.func @transform_2(%arg0: i32) -> (i32, i32) {
    %c0_i32 = arith.constant 0 : i32
    %c0_i32_0 = arith.constant 0 : i32
    return %arg0, %c0_i32 : i32, i32
  }
  func.func @transform_3(%arg0: i32) -> (i32, i32) {
    %c0_i32 = arith.constant 0 : i32
    %c0_i32_0 = arith.constant 0 : i32
    return %arg0, %c0_i32 : i32, i32
  }
  func.func @transform_4(%arg0: i32) -> (i32, i32) {
    %c0_i32 = arith.constant 0 : i32
    %c0_i32_0 = arith.constant 0 : i32
    %c0_i32_1 = arith.constant 0 : i32
    return %c0_i32, %c0_i32_0 : i32, i32
  }
  func.func @transform_5(%arg0: i32) -> (i32, i32) {
    %c0_i32 = arith.constant 0 : i32
    %c0_i32_0 = arith.constant 0 : i32
    %c0_i32_1 = arith.constant 0 : i32
    return %c0_i32, %c0_i32_0 : i32, i32
  }
  func.func @transform_6(%arg0: i32) -> (i32, i32) {
    %c0_i32 = arith.constant 0 : i32
    %c0_i32_0 = arith.constant 0 : i32
    %c0_i32_1 = arith.constant 0 : i32
    return %c0_i32, %c0_i32_0 : i32, i32
  }
  func.func @transform_7(%arg0: i32) -> (i32, i32) {
    %c0_i32 = arith.constant 0 : i32
    %c0_i32_0 = arith.constant 0 : i32
    %c0_i32_1 = arith.constant 0 : i32
    return %c0_i32, %c0_i32_0 : i32, i32
  }
  func.func @transform_8(%arg0: i32) -> (i32, i32) {
    %c0_i32 = arith.constant 0 : i32
    %c0_i32_0 = arith.constant 0 : i32
    %c0_i32_1 = arith.constant 0 : i32
    return %c0_i32, %c0_i32_0 : i32, i32
  }
  func.func @transform_9(%arg0: i32) -> (i32, i32) {
    %c0_i32 = arith.constant 0 : i32
    %c0_i32_0 = arith.constant 0 : i32
    return %arg0, %c0_i32 : i32, i32
  }
  func.func @transform_10(%arg0: i32) -> (i32, i32, i32) {
    %c0_i32 = arith.constant 0 : i32
    %c0_i32_0 = arith.constant 0 : i32
    %c0_i32_1 = arith.constant 0 : i32
    return %arg0, %c0_i32, %c0_i32_0 : i32, i32, i32
  }
}

</mosaic_0001>

<llo_original>
// kernel: tpu_custom_call.1
$region0: #{tpu_custom_call.1}
  #allocation0 [shape = 'u32[]', space=smem, size = 0x4, offset = 0x4, fixed_abs, tag = 'smem constant byte address 0x4 - core index']
  #allocation1 [shape = 'u32[72,128]{1,0:T(1,128)}', space=vmem, size = 0x9000, scoped, tag = 'internal scratch']
  %s0 = inlined_call_operand.vmem [shape: f32[32,8,32], index: 0, kind: input, shape index: {}]
  %s1 = inlined_call_operand.vmem [shape: f32[32,8,8], index: 1, kind: input, shape index: {}]
  %s2 = inlined_call_operand.vmem [shape: s32[32,1], index: 2, kind: input, shape index: {}]
  %s3 = inlined_call_operand.vmem [shape: f32[32,1], index: 3, kind: input, shape index: {}]
  %s4 = inlined_call_operand.vmem [shape: f32[32,32], index: 4, kind: input, shape index: {}]
  %s5 = inlined_call_operand.vmem [shape: f32[64,32], index: 5, kind: input, shape index: {}]
  %s6 = inlined_call_operand.vmem [shape: f32[1,32], index: 6, kind: input, shape index: {}]
  %s7 = inlined_call_operand.vmem [shape: f32[32,128], index: 7, kind: input, shape index: {}]
  %s8 = inlined_call_operand.vmem [shape: f32[1,128], index: 8, kind: input, shape index: {}]
  %s9 = inlined_call_operand.hbm [shape: f32[32,128], index: 9, kind: output, shape index: {0}]
  %s10 = inlined_call_operand.vmem [shape: f32[32,8,8], index: 10, kind: output, shape index: {1}]
  %11 = xla_tuple %s9, %s10
  %s12 = sld [smem:[#allocation0]]
  $region77: #{tpu_custom_call.1} parent=0
    _
  %s14 = ssub.s32 1, %s12
  %s15 = scalar_select 0, %s14, %s12
  $region1: #{tpu_custom_call.1} parent=0
    #allocation2 [shape = 'u8[16384]{0}', space=vmem, size = 0x4000, scoped, tag = 'output window, operand 0']
    #allocation3 [shape = 's32[2]{0}', space=sflag, size = 0x8, scoped, tag = 'scoped memory for tpu_custom_call.1']
    %16 = vsyncpa [#allocation3], 0
    %s17 = scalar_lea.sflag [#allocation3], 1
    %18 = vsyncpa %s17, 0
    loop: start=0, step=1, limit=4
    $region2: #{tpu_custom_call.1} parent=1 // loop_pre_header
      _
    $region3: #{tpu_custom_call.1} parent=1 // loop_header
      %s20 = sphi 0, %s24
      %p21 = scmp.ge.s32.totalorder %s20, 4
      %s30 = sphi 0, %s32
      %s33 = sphi 0, %s30
      %s34 = sphi 0, %s33
      %s50 = sphi 0, %s34
      %s56 = sphi 0, %s58
      %s59 = sphi 0, %s56
      %s60 = sphi 0, %s59
      %s76 = sphi 0, %s60
      %s82 = sphi 0, %s84
      %s85 = sphi 0, %s82
      %s86 = sphi 0, %s85
      %s102 = sphi 0, %s86
      %s108 = sphi 0, %s110
      %s111 = sphi 0, %s108
      %s112 = sphi 0, %s111
      %s128 = sphi 0, %s112
      %s132 = sphi 0, %s132
      %s134 = sphi 0, %s132
      %s135 = sphi 0, %s134
      %s149 = sphi 0, %s135
      %s153 = sphi 0, %s153
      %s155 = sphi 0, %s153
      %s156 = sphi 0, %s155
      %s170 = sphi 0, %s156
      %s174 = sphi 0, %s174
      %s176 = sphi 0, %s174
      %s177 = sphi 0, %s176
      %s191 = sphi 0, %s177
      %s195 = sphi 0, %s195
      %s197 = sphi 0, %s195
      %s198 = sphi 0, %s197
      %s212 = sphi 0, %s198
      %s216 = sphi 0, %s216
      %s218 = sphi 0, %s216
      %s219 = sphi 0, %s218
      %s233 = sphi 0, %s219
      %s239 = sphi 0, %s241
      %s242 = sphi 0, %s239
      %s243 = sphi 0, %s242
      %s259 = sphi 0, %s243
      %s265 = sphi 0, %s267
      %s268 = sphi 0, %s265
      %s269 = sphi 0, %s268
      %s285 = sphi 0, %s269
    $region4: #{tpu_custom_call.1} parent=1 // loop_header_branch
      %23 = sbr.rel (%p21) target = $region8
    $region5: #{tpu_custom_call.1} parent=1 // loop_body
      %s25 = ssub.s32 %s20, 1
      %s26 = ssub.s32 %s20, 2
      %s27 = sadd.s32 %s20, 1
      %s28 = ssub.s32 %s20, %s27
      %p29 = scmp.eq.s32.totalorder %s28, 0
      %s31 = sadd.s32 %s30, 1
      %s32 = scalar_select %p29, %s30, %s31
      %p35 = pneg %p29
      %p36 = scmp.eq.s32.totalorder %s20, 1
      %p37 = por %p35, %p36
      %p38 = scmp.ne.s32.totalorder %s30, %s33
      %p39 = scmp.eq.s32.totalorder %s20, 0
      %p40 = por %p38, %p39
      %p41 = scmp.ne.s32.totalorder %s30, %s33
      %p42 = scmp.eq.s32.totalorder %s25, 1
      %p43 = por %p41, %p42
      %p44 = scmp.ne.s32.totalorder %s33, %s34
      %p45 = scmp.eq.s32.totalorder %s25, 0
      %p46 = por %p44, %p45
      %p47 = scmp.ne.s32.totalorder %s33, %s34
      %p48 = scmp.eq.s32.totalorder %s26, 1
      %p49 = por %p47, %p48
      %p51 = scmp.ne.s32.totalorder %s34, %s50
      %p52 = scmp.eq.s32.totalorder %s26, 0
      %p53 = por %p51, %p52
      %s54 = ssub.s32 %s20, %s27
      %p55 = scmp.eq.s32.totalorder %s54, 0
      %s57 = sadd.s32 %s56, 1
      %s58 = scalar_select %p55, %s56, %s57
      %p61 = pneg %p55
      %p62 = scmp.eq.s32.totalorder %s20, 1
      %p63 = por %p61, %p62
      %p64 = scmp.ne.s32.totalorder %s56, %s59
      %p65 = scmp.eq.s32.totalorder %s20, 0
      %p66 = por %p64, %p65
      %p67 = scmp.ne.s32.totalorder %s56, %s59
      %p68 = scmp.eq.s32.totalorder %s25, 1
      %p69 = por %p67, %p68
      %p70 = scmp.ne.s32.totalorder %s59, %s60
      %p71 = scmp.eq.s32.totalorder %s25, 0
      %p72 = por %p70, %p71
      %p73 = scmp.ne.s32.totalorder %s59, %s60
      %p74 = scmp.eq.s32.totalorder %s26, 1
      %p75 = por %p73, %p74
      %p77 = scmp.ne.s32.totalorder %s60, %s76
      %p78 = scmp.eq.s32.totalorder %s26, 0
      %p79 = por %p77, %p78
      %s80 = ssub.s32 %s20, %s27
      %p81 = scmp.eq.s32.totalorder %s80, 0
      %s83 = sadd.s32 %s82, 1
      %s84 = scalar_select %p81, %s82, %s83
      %p87 = pneg %p81
      %p88 = scmp.eq.s32.totalorder %s20, 1
      %p89 = por %p87, %p88
      %p90 = scmp.ne.s32.totalorder %s82, %s85
      %p91 = scmp.eq.s32.totalorder %s20, 0
      %p92 = por %p90, %p91
      %p93 = scmp.ne.s32.totalorder %s82, %s85
      %p94 = scmp.eq.s32.totalorder %s25, 1
      %p95 = por %p93, %p94
      %p96 = scmp.ne.s32.totalorder %s85, %s86
      %p97 = scmp.eq.s32.totalorder %s25, 0
      %p98 = por %p96, %p97
      %p99 = scmp.ne.s32.totalorder %s85, %s86
      %p100 = scmp.eq.s32.totalorder %s26, 1
      %p101 = por %p99, %p100
      %p103 = scmp.ne.s32.totalorder %s86, %s102
      %p104 = scmp.eq.s32.totalorder %s26, 0
      %p105 = por %p103, %p104
      %s106 = ssub.s32 %s20, %s27
      %p107 = scmp.eq.s32.totalorder %s106, 0
      %s109 = sadd.s32 %s108, 1
      %s110 = scalar_select %p107, %s108, %s109
      %p113 = pneg %p107
      %p114 = scmp.eq.s32.totalorder %s20, 1
      %p115 = por %p113, %p114
      %p116 = scmp.ne.s32.totalorder %s108, %s111
      %p117 = scmp.eq.s32.totalorder %s20, 0
      %p118 = por %p116, %p117
      %p119 = scmp.ne.s32.totalorder %s108, %s111
      %p120 = scmp.eq.s32.totalorder %s25, 1
      %p121 = por %p119, %p120
      %p122 = scmp.ne.s32.totalorder %s111, %s112
      %p123 = scmp.eq.s32.totalorder %s25, 0
      %p124 = por %p122, %p123
      %p125 = scmp.ne.s32.totalorder %s111, %s112
      %p126 = scmp.eq.s32.totalorder %s26, 1
      %p127 = por %p125, %p126
      %p129 = scmp.ne.s32.totalorder %s112, %s128
      %p130 = scmp.eq.s32.totalorder %s26, 0
      %p131 = por %p129, %p130
      %s133 = sadd.s32 %s132, 1
      %p136 = scmp.eq.s32.totalorder %s20, 1
      %p137 = scmp.ne.s32.totalorder %s132, %s134
      %p138 = scmp.eq.s32.totalorder %s20, 0
      %p139 = por %p137, %p138
      %p140 = scmp.ne.s32.totalorder %s132, %s134
      %p141 = scmp.eq.s32.totalorder %s25, 1
      %p142 = por %p140, %p141
      %p143 = scmp.ne.s32.totalorder %s134, %s135
      %p144 = scmp.eq.s32.totalorder %s25, 0
      %p145 = por %p143, %p144
      %p146 = scmp.ne.s32.totalorder %s134, %s135
      %p147 = scmp.eq.s32.totalorder %s26, 1
      %p148 = por %p146, %p147
      %p150 = scmp.ne.s32.totalorder %s135, %s149
      %p151 = scmp.eq.s32.totalorder %s26, 0
      %p152 = por %p150, %p151
      %s154 = sadd.s32 %s153, 1
      %p157 = scmp.eq.s32.totalorder %s20, 1
      %p158 = scmp.ne.s32.totalorder %s153, %s155
      %p159 = scmp.eq.s32.totalorder %s20, 0
      %p160 = por %p158, %p159
      %p161 = scmp.ne.s32.totalorder %s153, %s155
      %p162 = scmp.eq.s32.totalorder %s25, 1
      %p163 = por %p161, %p162
      %p164 = scmp.ne.s32.totalorder %s155, %s156
      %p165 = scmp.eq.s32.totalorder %s25, 0
      %p166 = por %p164, %p165
      %p167 = scmp.ne.s32.totalorder %s155, %s156
      %p168 = scmp.eq.s32.totalorder %s26, 1
      %p169 = por %p167, %p168
      %p171 = scmp.ne.s32.totalorder %s156, %s170
      %p172 = scmp.eq.s32.totalorder %s26, 0
      %p173 = por %p171, %p172
      %s175 = sadd.s32 %s174, 1
      %p178 = scmp.eq.s32.totalorder %s20, 1
      %p179 = scmp.ne.s32.totalorder %s174, %s176
      %p180 = scmp.eq.s32.totalorder %s20, 0
      %p181 = por %p179, %p180
      %p182 = scmp.ne.s32.totalorder %s174, %s176
      %p183 = scmp.eq.s32.totalorder %s25, 1
      %p184 = por %p182, %p183
      %p185 = scmp.ne.s32.totalorder %s176, %s177
      %p186 = scmp.eq.s32.totalorder %s25, 0
      %p187 = por %p185, %p186
      %p188 = scmp.ne.s32.totalorder %s176, %s177
      %p189 = scmp.eq.s32.totalorder %s26, 1
      %p190 = por %p188, %p189
      %p192 = scmp.ne.s32.totalorder %s177, %s191
      %p193 = scmp.eq.s32.totalorder %s26, 0
      %p194 = por %p192, %p193
      %s196 = sadd.s32 %s195, 1
      %p199 = scmp.eq.s32.totalorder %s20, 1
      %p200 = scmp.ne.s32.totalorder %s195, %s197
      %p201 = scmp.eq.s32.totalorder %s20, 0
      %p202 = por %p200, %p201
      %p203 = scmp.ne.s32.totalorder %s195, %s197
      %p204 = scmp.eq.s32.totalorder %s25, 1
      %p205 = por %p203, %p204
      %p206 = scmp.ne.s32.totalorder %s197, %s198
      %p207 = scmp.eq.s32.totalorder %s25, 0
      %p208 = por %p206, %p207
      %p209 = scmp.ne.s32.totalorder %s197, %s198
      %p210 = scmp.eq.s32.totalorder %s26, 1
      %p211 = por %p209, %p210
      %p213 = scmp.ne.s32.totalorder %s198, %s212
      %p214 = scmp.eq.s32.totalorder %s26, 0
      %p215 = por %p213, %p214
      %s217 = sadd.s32 %s216, 1
      %p220 = scmp.eq.s32.totalorder %s20, 1
      %p221 = scmp.ne.s32.totalorder %s216, %s218
      %p222 = scmp.eq.s32.totalorder %s20, 0
      %p223 = por %p221, %p222
      %p224 = scmp.ne.s32.totalorder %s216, %s218
      %p225 = scmp.eq.s32.totalorder %s25, 1
      %p226 = por %p224, %p225
      %p227 = scmp.ne.s32.totalorder %s218, %s219
      %p228 = scmp.eq.s32.totalorder %s25, 0
      %p229 = por %p227, %p228
      %p230 = scmp.ne.s32.totalorder %s218, %s219
      %p231 = scmp.eq.s32.totalorder %s26, 1
      %p232 = por %p230, %p231
      %p234 = scmp.ne.s32.totalorder %s219, %s233
      %p235 = scmp.eq.s32.totalorder %s26, 0
      %p236 = por %p234, %p235
      %s237 = ssub.s32 %s20, %s27
      %p238 = scmp.eq.s32.totalorder %s237, 0
      %s240 = sadd.s32 %s239, 1
      %s241 = scalar_select %p238, %s239, %s240
      %p244 = pneg %p238
      %p245 = scmp.eq.s32.totalorder %s20, 1
      %p246 = por %p244, %p245
      %p247 = scmp.ne.s32.totalorder %s239, %s242
      %p248 = scmp.eq.s32.totalorder %s20, 0
      %p249 = por %p247, %p248
      %p250 = scmp.ne.s32.totalorder %s239, %s242
      %p251 = scmp.eq.s32.totalorder %s25, 1
      %p252 = por %p250, %p251
      %p253 = scmp.ne.s32.totalorder %s242, %s243
      %p254 = scmp.eq.s32.totalorder %s25, 0
      %p255 = por %p253, %p254
      %p256 = scmp.ne.s32.totalorder %s242, %s243
      %p257 = scmp.eq.s32.totalorder %s26, 1
      %p258 = por %p256, %p257
      %p260 = scmp.ne.s32.totalorder %s243, %s259
      %p261 = scmp.eq.s32.totalorder %s26, 0
      %p262 = por %p260, %p261
      %s263 = ssub.s32 %s20, %s27
      %p264 = scmp.eq.s32.totalorder %s263, 0
      %s266 = sadd.s32 %s265, 1
      %s267 = scalar_select %p264, %s265, %s266
      %p270 = pneg %p264
      %p271 = scmp.eq.s32.totalorder %s20, 1
      %p272 = por %p270, %p271
      %p273 = scmp.ne.s32.totalorder %s265, %s268
      %p274 = scmp.eq.s32.totalorder %s20, 0
      %p275 = por %p273, %p274
      %p276 = scmp.ne.s32.totalorder %s265, %s268
      %p277 = scmp.eq.s32.totalorder %s25, 1
      %p278 = por %p276, %p277
      %p279 = scmp.ne.s32.totalorder %s268, %s269
      %p280 = scmp.eq.s32.totalorder %s25, 0
      %p281 = por %p279, %p280
      %p282 = scmp.ne.s32.totalorder %s268, %s269
      %p283 = scmp.eq.s32.totalorder %s26, 1
      %p284 = por %p282, %p283
      %p286 = scmp.ne.s32.totalorder %s269, %s285
      %p287 = scmp.eq.s32.totalorder %s26, 0
      %p288 = por %p286, %p287
      %p289 = scmp.le.s32.totalorder 1, %s20
      %p290 = scmp.lt.s32.totalorder %s20, 3
      %p291 = pnand %p289, %p290
      %p292 = pneg %p291
      // Predicated region
      $region9: #{tpu_custom_call.1} parent=5 // pred_check
        _
      $region10: #{tpu_custom_call.1} parent=5 // pred_check_branch
        %294 = sbr.rel (%p291) target = $region12
      $region11: #{tpu_custom_call.1} parent=5 // pred_region
        %s295 = ssub.s32 %s20, 1
        // Predicated region
        $region13: #{tpu_custom_call.1} parent=11 // pred_check
          %p296 = pneg %p145
        $region14: #{tpu_custom_call.1} parent=11 // pred_check_branch
          %298 = sbr.rel (%p296) target = $region16
        $region15: #{tpu_custom_call.1} parent=11 // pred_region
          _
        $region16: #{tpu_custom_call.1} parent=11 // pred_fallthru
          _
        // Predicated region
        $region17: #{tpu_custom_call.1} parent=11 // pred_check
          %p299 = pneg %p166
        $region18: #{tpu_custom_call.1} parent=11 // pred_check_branch
          %301 = sbr.rel (%p299) target = $region20
        $region19: #{tpu_custom_call.1} parent=11 // pred_region
          _
        $region20: #{tpu_custom_call.1} parent=11 // pred_fallthru
          _
        // Predicated region
        $region21: #{tpu_custom_call.1} parent=11 // pred_check
          %p302 = pneg %p187
        $region22: #{tpu_custom_call.1} parent=11 // pred_check_branch
          %304 = sbr.rel (%p302) target = $region24
        $region23: #{tpu_custom_call.1} parent=11 // pred_region
          _
        $region24: #{tpu_custom_call.1} parent=11 // pred_fallthru
          _
        // Predicated region
        $region25: #{tpu_custom_call.1} parent=11 // pred_check
          %p305 = pneg %p208
        $region26: #{tpu_custom_call.1} parent=11 // pred_check_branch
          %307 = sbr.rel (%p305) target = $region28
        $region27: #{tpu_custom_call.1} parent=11 // pred_region
          _
        $region28: #{tpu_custom_call.1} parent=11 // pred_fallthru
          _
        // Predicated region
        $region29: #{tpu_custom_call.1} parent=11 // pred_check
          %p308 = pneg %p229
        $region30: #{tpu_custom_call.1} parent=11 // pred_check_branch
          %310 = sbr.rel (%p308) target = $region32
        $region31: #{tpu_custom_call.1} parent=11 // pred_region
          _
        $region32: #{tpu_custom_call.1} parent=11 // pred_fallthru
          _
      $region12: #{tpu_custom_call.1} parent=5 // pred_fallthru
        _
      %p311 = scmp.lt.s32.totalorder %s20, 2
      // Predicated region
      $region33: #{tpu_custom_call.1} parent=5 // pred_check
        %p312 = pneg %p311
      $region34: #{tpu_custom_call.1} parent=5 // pred_check_branch
        %314 = sbr.rel (%p312) target = $region36
      $region35: #{tpu_custom_call.1} parent=5 // pred_region
        // Predicated region
        $region37: #{tpu_custom_call.1} parent=35 // pred_check
          %p315 = pneg %p40
        $region38: #{tpu_custom_call.1} parent=35 // pred_check_branch
          %317 = sbr.rel (%p315) target = $region40
        $region39: #{tpu_custom_call.1} parent=35 // pred_region
          %s318 = smul.u32 16, %s20
          %p319 = scmp.lt.s32.totalorder %s318, 31
          %s320 = scalar_select %p319, %s318, 31
          %s321 = smul.addr %s320, 8
          %s322 = scalar_lea.vmem %s0, %s321
          %s323 = smul.u32 16, %s20
        $region40: #{tpu_custom_call.1} parent=35 // pred_fallthru
          _
        // Predicated region
        $region41: #{tpu_custom_call.1} parent=35 // pred_check
          %p324 = pneg %p66
        $region42: #{tpu_custom_call.1} parent=35 // pred_check_branch
          %326 = sbr.rel (%p324) target = $region44
        $region43: #{tpu_custom_call.1} parent=35 // pred_region
          %s327 = smul.u32 16, %s20
          %p328 = scmp.lt.s32.totalorder %s327, 31
          %s329 = scalar_select %p328, %s327, 31
          %s330 = smul.addr %s329, 8
          %s331 = scalar_lea.vmem %s1, %s330
          %s332 = smul.u32 16, %s20
        $region44: #{tpu_custom_call.1} parent=35 // pred_fallthru
          _
        // Predicated region
        $region45: #{tpu_custom_call.1} parent=35 // pred_check
          %p333 = pneg %p92
        $region46: #{tpu_custom_call.1} parent=35 // pred_check_branch
          %335 = sbr.rel (%p333) target = $region48
        $region47: #{tpu_custom_call.1} parent=35 // pred_region
          %s336 = smul.u32 2, %s20
          %p337 = scmp.lt.s32.totalorder %s336, 3
          %s338 = scalar_select %p337, %s336, 3
          %s339 = smul.addr %s338, 8
          %s340 = scalar_lea.vmem %s2, %s339
          %s341 = smul.u32 2, %s20
        $region48: #{tpu_custom_call.1} parent=35 // pred_fallthru
          _
        // Predicated region
        $region49: #{tpu_custom_call.1} parent=35 // pred_check
          %p342 = pneg %p118
        $region50: #{tpu_custom_call.1} parent=35 // pred_check_branch
          %344 = sbr.rel (%p342) target = $region52
        $region51: #{tpu_custom_call.1} parent=35 // pred_region
          %s345 = smul.u32 2, %s20
          %p346 = scmp.lt.s32.totalorder %s345, 3
          %s347 = scalar_select %p346, %s345, 3
          %s348 = smul.addr %s347, 8
          %s349 = scalar_lea.vmem %s3, %s348
          %s350 = smul.u32 2, %s20
        $region52: #{tpu_custom_call.1} parent=35 // pred_fallthru
          _
      $region36: #{tpu_custom_call.1} parent=5 // pred_fallthru
        _
      %p351 = scmp.le.s32.totalorder 1, %s20
      %p352 = scmp.lt.s32.totalorder %s20, 3
      %p353 = pnand %p351, %p352
      %p354 = pneg %p353
      // Predicated region
      $region53: #{tpu_custom_call.1} parent=5 // pred_check
        _
      $region54: #{tpu_custom_call.1} parent=5 // pred_check_branch
        %356 = sbr.rel (%p353) target = $region56
      $region55: #{tpu_custom_call.1} parent=5 // pred_region
        %s357 = ssub.s32 %s20, 1
        %s358 = smul.u32 16, %s25
        %p359 = scmp.lt.s32.totalorder %s358, 31
        %s360 = scalar_select %p359, %s358, 31
        %s361 = smul.addr %s360, 8
        %s362 = scalar_lea.vmem %s0, %s361
        %p363 = pneg %p46
        %p364 = pneg %p43
        %s365 = smul.u32 16, %s25
        %p366 = scmp.lt.s32.totalorder %s365, 31
        %s367 = scalar_select %p366, %s365, 31
        %s368 = smul.addr %s367, 8
        %s369 = scalar_lea.vmem %s1, %s368
        %p370 = pneg %p72
        %p371 = pneg %p69
        %s372 = smul.u32 2, %s25
        %p373 = scmp.lt.s32.totalorder %s372, 3
        %s374 = scalar_select %p373, %s372, 3
        %s375 = smul.addr %s374, 8
        %s376 = scalar_lea.vmem %s2, %s375
        %p377 = pneg %p98
        %p378 = pneg %p95
        %s379 = smul.u32 2, %s25
        %p380 = scmp.lt.s32.totalorder %s379, 3
        %s381 = scalar_select %p380, %s379, 3
        %s382 = smul.addr %s381, 8
        %s383 = scalar_lea.vmem %s3, %s382
        %p384 = pneg %p124
        %p385 = pneg %p121
        %p386 = pneg %p145
        %p387 = pneg %p142
        %p388 = pneg %p166
        %p389 = pneg %p163
        %p390 = pneg %p187
        %p391 = pneg %p184
        %p392 = pneg %p208
        %p393 = pneg %p205
        %p394 = pneg %p229
        %p395 = pneg %p226
        %p396 = pneg %p255
        %p397 = pneg %p252
        %s398 = sand.u32 %s242, 1
        %s399 = scalar_lea.sflag [#allocation3], %s398
        %s400 = sand.u32 %s242, 1
        %s401 = smul.addr %s400, 16
        %s402 = scalar_lea.vmem [#allocation2], %s401
        %p403 = pneg %p281
        %p404 = pneg %p278
        %s405 = smul.u32 16, %s25
        %p406 = scmp.lt.s32.totalorder %s405, 31
        %s407 = scalar_select %p406, %s405, 31
        %s408 = smul.addr %s407, 8
        %s409 = scalar_lea.vmem %s10, %s408
        %s410 = smul.u32 16, %s25
        %p411 = scmp.lt.s32.totalorder %s410, 31
        %s412 = scalar_select %p411, %s410, 31
        %s413 = smul.addr %s412, 8
        %s414 = scalar_lea.vmem %s0, %s413
        %s415 = smul.u32 16, %s25
        %s416 = smul.u32 16, %s25
        %p417 = scmp.lt.s32.totalorder %s416, 31
        %s418 = scalar_select %p417, %s416, 31
        %s419 = smul.addr %s418, 8
        %s420 = scalar_lea.vmem %s1, %s419
        %s421 = smul.u32 16, %s25
        %s422 = smul.u32 2, %s25
        %p423 = scmp.lt.s32.totalorder %s422, 3
        %s424 = scalar_select %p423, %s422, 3
        %s425 = smul.addr %s424, 8
        %s426 = scalar_lea.vmem %s2, %s425
        %s427 = smul.u32 2, %s25
        %s428 = smul.u32 2, %s25
        %p429 = scmp.lt.s32.totalorder %s428, 3
        %s430 = scalar_select %p429, %s428, 3
        %s431 = smul.addr %s430, 8
        %s432 = scalar_lea.vmem %s3, %s431
        %s433 = smul.u32 2, %s25
        %s434 = smul.u32 2, %s25
        %s435 = smul.u32 16, %s25
        %p436 = scmp.lt.s32.totalorder %s435, 31
        %s437 = scalar_select %p436, %s435, 31
        %s438 = smul.addr %s437, 8
        %s439 = scalar_lea.vmem %s10, %s438
        %s440 = smul.u32 16, %s25
        %v441 = vld [vmem:[%s414] sm:$0xff]
        %v442 = vld [vmem:[%s414 + $0x8] sm:$0xff]
        %v443 = vld [vmem:[%s414 + $0x10] sm:$0xff]
        %v444 = vld [vmem:[%s414 + $0x18] sm:$0xff]
        %v445 = vld [vmem:[%s414 + $0x20] sm:$0xff]
        %v446 = vld [vmem:[%s414 + $0x28] sm:$0xff]
        %v447 = vld [vmem:[%s414 + $0x30] sm:$0xff]
        %v448 = vld [vmem:[%s414 + $0x38] sm:$0xff]
        %v449 = vld [vmem:[%s414 + $0x40] sm:$0xff]
        %v450 = vld [vmem:[%s414 + $0x48] sm:$0xff]
        %v451 = vld [vmem:[%s414 + $0x50] sm:$0xff]
        %v452 = vld [vmem:[%s414 + $0x58] sm:$0xff]
        %v453 = vld [vmem:[%s414 + $0x60] sm:$0xff]
        %v454 = vld [vmem:[%s414 + $0x68] sm:$0xff]
        %v455 = vld [vmem:[%s414 + $0x70] sm:$0xff]
        %v456 = vld [vmem:[%s414 + $0x78] sm:$0xff]
        %v457 = vld [vmem:[%s420] sm:$0xff]
        %v458 = vld [vmem:[%s420 + $0x8] sm:$0xff]
        %v459 = vld [vmem:[%s420 + $0x10] sm:$0xff]
        %v460 = vld [vmem:[%s420 + $0x18] sm:$0xff]
        %v461 = vld [vmem:[%s420 + $0x20] sm:$0xff]
        %v462 = vld [vmem:[%s420 + $0x28] sm:$0xff]
        %v463 = vld [vmem:[%s420 + $0x30] sm:$0xff]
        %v464 = vld [vmem:[%s420 + $0x38] sm:$0xff]
        %v465 = vld [vmem:[%s420 + $0x40] sm:$0xff]
        %v466 = vld [vmem:[%s420 + $0x48] sm:$0xff]
        %v467 = vld [vmem:[%s420 + $0x50] sm:$0xff]
        %v468 = vld [vmem:[%s420 + $0x58] sm:$0xff]
        %v469 = vld [vmem:[%s420 + $0x60] sm:$0xff]
        %v470 = vld [vmem:[%s420 + $0x68] sm:$0xff]
        %v471 = vld [vmem:[%s420 + $0x70] sm:$0xff]
        %v472 = vld [vmem:[%s420 + $0x78] sm:$0xff]
        %v473 = vld [vmem:[%s426] sm:$0xff]
        %v474 = vld [vmem:[%s426 + $0x8] sm:$0xff]
        %v475 = vld [vmem:[%s432] sm:$0xff]
        %v476 = vld [vmem:[%s432 + $0x8] sm:$0xff]
        %v477 = vrot.slane %v473, 1
        %v478 = vrot.slane %v473, 2
        %v479 = vrot.slane %v473, 3
        %v480 = vrot.slane %v473, 4
        %v481 = vrot.slane %v473, 5
        %v482 = vrot.slane %v473, 6
        %v483 = vrot.slane %v473, 7
        %v484 = vrot.slane %v474, 1
        %v485 = vrot.slane %v474, 2
        %v486 = vrot.slane %v474, 3
        %v487 = vrot.slane %v474, 4
        %v488 = vrot.slane %v474, 5
        %v489 = vrot.slane %v474, 6
        %v490 = vrot.slane %v474, 7
        %v491 = vld [vmem:[%s4] sm:$0xff]
        %v492 = vld [vmem:[%s4 + $0x8] sm:$0xff]
        %v493 = vld [vmem:[%s4 + $0x10] sm:$0xff]
        %v494 = vld [vmem:[%s4 + $0x18] sm:$0xff]
        %vm495 = vcmask 261120
        %v497 = vsel %vm495, %v441, 0
        %v500 = vsel %vm495, %v442, 0
        %v503 = vsel %vm495, %v443, 0
        %v506 = vsel %vm495, %v444, 0
        %v509 = vsel %vm495, %v445, 0
        %v512 = vsel %vm495, %v446, 0
        %v515 = vsel %vm495, %v447, 0
        %v518 = vsel %vm495, %v448, 0
        %v521 = vsel %vm495, %v449, 0
        %v524 = vsel %vm495, %v450, 0
        %v527 = vsel %vm495, %v451, 0
        %v530 = vsel %vm495, %v452, 0
        %v533 = vsel %vm495, %v453, 0
        %v536 = vsel %vm495, %v454, 0
        %v539 = vsel %vm495, %v455, 0
        %v542 = vsel %vm495, %v456, 0
        %544 = vmatpush.msra.mxu0 0.0
        %545 = vmatpush.msra.mxu0 0.0
        %546 = vmatpush.msra.mxu0 0.0
        %547 = vmatpush.msra.mxu0 0.0
        %548 = vmatpush.msra.mxu0 0.0
        %549 = vmatpush.msra.mxu0 0.0
        %550 = vmatpush.msra.mxu0 0.0
        %551 = vmatpush.msra.mxu0 0.0
        %552 = vmatpush.msra.mxu0 0.0
        %553 = vmatpush.msra.mxu0 0.0
        %554 = vmatpush.msra.mxu0 0.0
        %555 = vmatpush.msra.mxu0 0.0
        %556 = vmatpush.msra.mxu0 %v494
        %557 = vmatpush.msra.mxu0 %v493
        %558 = vmatpush.msra.mxu0 %v492
        %559 = vmatpush.msra.mxu0 %v491
        %560 = vmatmul.f32.gmra.mxu0 %v497
        %v561 = vpop.f32.mrf.mxu0
        %v562 = vadd.f32 0.0, %v561
        %563 = vmatmul.f32.gmra.mxu0 %v500
        %v564 = vpop.f32.mrf.mxu0
        %v565 = vadd.f32 0.0, %v564
        %566 = vmatmul.f32.gmra.mxu0 %v503
        %v567 = vpop.f32.mrf.mxu0
        %v568 = vadd.f32 0.0, %v567
        %569 = vmatmul.f32.gmra.mxu0 %v506
        %v570 = vpop.f32.mrf.mxu0
        %v571 = vadd.f32 0.0, %v570
        %572 = vmatmul.f32.gmra.mxu0 %v509
        %v573 = vpop.f32.mrf.mxu0
        %v574 = vadd.f32 0.0, %v573
        %575 = vmatmul.f32.gmra.mxu0 %v512
        %v576 = vpop.f32.mrf.mxu0
        %v577 = vadd.f32 0.0, %v576
        %578 = vmatmul.f32.gmra.mxu0 %v515
        %v579 = vpop.f32.mrf.mxu0
        %v580 = vadd.f32 0.0, %v579
        %581 = vmatmul.f32.gmra.mxu0 %v518
        %v582 = vpop.f32.mrf.mxu0
        %v583 = vadd.f32 0.0, %v582
        %584 = vmatmul.f32.gmra.mxu0 %v521
        %v585 = vpop.f32.mrf.mxu0
        %v586 = vadd.f32 0.0, %v585
        %587 = vmatmul.f32.gmra.mxu0 %v524
        %v588 = vpop.f32.mrf.mxu0
        %v589 = vadd.f32 0.0, %v588
        %590 = vmatmul.f32.gmra.mxu0 %v527
        %v591 = vpop.f32.mrf.mxu0
        %v592 = vadd.f32 0.0, %v591
        %593 = vmatmul.f32.gmra.mxu0 %v530
        %v594 = vpop.f32.mrf.mxu0
        %v595 = vadd.f32 0.0, %v594
        %596 = vmatmul.f32.gmra.mxu0 %v533
        %v597 = vpop.f32.mrf.mxu0
        %v598 = vadd.f32 0.0, %v597
        %599 = vmatmul.f32.gmra.mxu0 %v536
        %v600 = vpop.f32.mrf.mxu0
        %v601 = vadd.f32 0.0, %v600
        %602 = vmatmul.f32.gmra.mxu0 %v539
        %v603 = vpop.f32.mrf.mxu0
        %v604 = vadd.f32 0.0, %v603
        %605 = vmatmul.f32.gmra.mxu0 %v542
        %v606 = vpop.f32.mrf.mxu0
        %v607 = vadd.f32 0.0, %v606
        %608 = vdwg.mxu0
        %v610 = vsel %vm495, %v562, 0
        %612 = vmatpush.xpose.msra.mxu0 0.0
        %613 = vmatpush.xpose.msra.mxu0 0.0
        %614 = vmatpush.xpose.msra.mxu0 0.0
        %615 = vmatpush.xpose.msra.mxu0 0.0
        %616 = vmatpush.xpose.msra.mxu0 0.0
        %617 = vmatpush.xpose.msra.mxu0 0.0
        %618 = vmatpush.xpose.msra.mxu0 0.0
        %619 = vmatpush.xpose.msra.mxu0 0.0
        %620 = vmatpush.xpose.msra.mxu0 0.0
        %621 = vmatpush.xpose.msra.mxu0 0.0
        %622 = vmatpush.xpose.msra.mxu0 0.0
        %623 = vmatpush.xpose.msra.mxu0 0.0
        %624 = vmatpush.xpose.msra.mxu0 0.0
        %625 = vmatpush.xpose.msra.mxu0 0.0
        %626 = vmatpush.xpose.msra.mxu0 0.0
        %627 = vmatpush.xpose.msra.mxu0 %v497
        %628 = vmatmul.f32.gmra.mxu0 %v610
        %v629 = vpop.f32.mrf.mxu0
        %v630 = vadd.f32 0.0, %v629
        %631 = vdwg.mxu0
        %v633 = vsel %vm495, %v565, 0
        %635 = vmatpush.xpose.msra.mxu0 0.0
        %636 = vmatpush.xpose.msra.mxu0 0.0
        %637 = vmatpush.xpose.msra.mxu0 0.0
        %638 = vmatpush.xpose.msra.mxu0 0.0
        %639 = vmatpush.xpose.msra.mxu0 0.0
        %640 = vmatpush.xpose.msra.mxu0 0.0
        %641 = vmatpush.xpose.msra.mxu0 0.0
        %642 = vmatpush.xpose.msra.mxu0 0.0
        %643 = vmatpush.xpose.msra.mxu0 0.0
        %644 = vmatpush.xpose.msra.mxu0 0.0
        %645 = vmatpush.xpose.msra.mxu0 0.0
        %646 = vmatpush.xpose.msra.mxu0 0.0
        %647 = vmatpush.xpose.msra.mxu0 0.0
        %648 = vmatpush.xpose.msra.mxu0 0.0
        %649 = vmatpush.xpose.msra.mxu0 0.0
        %650 = vmatpush.xpose.msra.mxu0 %v500
        %651 = vmatmul.f32.gmra.mxu0 %v633
        %v652 = vpop.f32.mrf.mxu0
        %v653 = vadd.f32 0.0, %v652
        %654 = vdwg.mxu0
        %v656 = vsel %vm495, %v568, 0
        %658 = vmatpush.xpose.msra.mxu0 0.0
        %659 = vmatpush.xpose.msra.mxu0 0.0
        %660 = vmatpush.xpose.msra.mxu0 0.0
        %661 = vmatpush.xpose.msra.mxu0 0.0
        %662 = vmatpush.xpose.msra.mxu0 0.0
        %663 = vmatpush.xpose.msra.mxu0 0.0
        %664 = vmatpush.xpose.msra.mxu0 0.0
        %665 = vmatpush.xpose.msra.mxu0 0.0
        %666 = vmatpush.xpose.msra.mxu0 0.0
        %667 = vmatpush.xpose.msra.mxu0 0.0
        %668 = vmatpush.xpose.msra.mxu0 0.0
        %669 = vmatpush.xpose.msra.mxu0 0.0
        %670 = vmatpush.xpose.msra.mxu0 0.0
        %671 = vmatpush.xpose.msra.mxu0 0.0
        %672 = vmatpush.xpose.msra.mxu0 0.0
        %673 = vmatpush.xpose.msra.mxu0 %v503
        %674 = vmatmul.f32.gmra.mxu0 %v656
        %v675 = vpop.f32.mrf.mxu0
        %v676 = vadd.f32 0.0, %v675
        %677 = vdwg.mxu0
        %v679 = vsel %vm495, %v571, 0
        %681 = vmatpush.xpose.msra.mxu0 0.0
        %682 = vmatpush.xpose.msra.mxu0 0.0
        %683 = vmatpush.xpose.msra.mxu0 0.0
        %684 = vmatpush.xpose.msra.mxu0 0.0
        %685 = vmatpush.xpose.msra.mxu0 0.0
        %686 = vmatpush.xpose.msra.mxu0 0.0
        %687 = vmatpush.xpose.msra.mxu0 0.0
        %688 = vmatpush.xpose.msra.mxu0 0.0
        %689 = vmatpush.xpose.msra.mxu0 0.0
        %690 = vmatpush.xpose.msra.mxu0 0.0
        %691 = vmatpush.xpose.msra.mxu0 0.0
        %692 = vmatpush.xpose.msra.mxu0 0.0
        %693 = vmatpush.xpose.msra.mxu0 0.0
        %694 = vmatpush.xpose.msra.mxu0 0.0
        %695 = vmatpush.xpose.msra.mxu0 0.0
        %696 = vmatpush.xpose.msra.mxu0 %v506
        %697 = vmatmul.f32.gmra.mxu0 %v679
        %v698 = vpop.f32.mrf.mxu0
        %v699 = vadd.f32 0.0, %v698
        %700 = vdwg.mxu0
        %v702 = vsel %vm495, %v574, 0
        %704 = vmatpush.xpose.msra.mxu0 0.0
        %705 = vmatpush.xpose.msra.mxu0 0.0
        %706 = vmatpush.xpose.msra.mxu0 0.0
        %707 = vmatpush.xpose.msra.mxu0 0.0
        %708 = vmatpush.xpose.msra.mxu0 0.0
        %709 = vmatpush.xpose.msra.mxu0 0.0
        %710 = vmatpush.xpose.msra.mxu0 0.0
        %711 = vmatpush.xpose.msra.mxu0 0.0
        %712 = vmatpush.xpose.msra.mxu0 0.0
        %713 = vmatpush.xpose.msra.mxu0 0.0
        %714 = vmatpush.xpose.msra.mxu0 0.0
        %715 = vmatpush.xpose.msra.mxu0 0.0
        %716 = vmatpush.xpose.msra.mxu0 0.0
        %717 = vmatpush.xpose.msra.mxu0 0.0
        %718 = vmatpush.xpose.msra.mxu0 0.0
        %719 = vmatpush.xpose.msra.mxu0 %v509
        %720 = vmatmul.f32.gmra.mxu0 %v702
        %v721 = vpop.f32.mrf.mxu0
        %v722 = vadd.f32 0.0, %v721
        %723 = vdwg.mxu0
        %v725 = vsel %vm495, %v577, 0
        %727 = vmatpush.xpose.msra.mxu0 0.0
        %728 = vmatpush.xpose.msra.mxu0 0.0
        %729 = vmatpush.xpose.msra.mxu0 0.0
        %730 = vmatpush.xpose.msra.mxu0 0.0
        %731 = vmatpush.xpose.msra.mxu0 0.0
        %732 = vmatpush.xpose.msra.mxu0 0.0
        %733 = vmatpush.xpose.msra.mxu0 0.0
        %734 = vmatpush.xpose.msra.mxu0 0.0
        %735 = vmatpush.xpose.msra.mxu0 0.0
        %736 = vmatpush.xpose.msra.mxu0 0.0
        %737 = vmatpush.xpose.msra.mxu0 0.0
        %738 = vmatpush.xpose.msra.mxu0 0.0
        %739 = vmatpush.xpose.msra.mxu0 0.0
        %740 = vmatpush.xpose.msra.mxu0 0.0
        %741 = vmatpush.xpose.msra.mxu0 0.0
        %742 = vmatpush.xpose.msra.mxu0 %v512
        %743 = vmatmul.f32.gmra.mxu0 %v725
        %v744 = vpop.f32.mrf.mxu0
        %v745 = vadd.f32 0.0, %v744
        %746 = vdwg.mxu0
        %v748 = vsel %vm495, %v580, 0
        %750 = vmatpush.xpose.msra.mxu0 0.0
        %751 = vmatpush.xpose.msra.mxu0 0.0
        %752 = vmatpush.xpose.msra.mxu0 0.0
        %753 = vmatpush.xpose.msra.mxu0 0.0
        %754 = vmatpush.xpose.msra.mxu0 0.0
        %755 = vmatpush.xpose.msra.mxu0 0.0
        %756 = vmatpush.xpose.msra.mxu0 0.0
        %757 = vmatpush.xpose.msra.mxu0 0.0
        %758 = vmatpush.xpose.msra.mxu0 0.0
        %759 = vmatpush.xpose.msra.mxu0 0.0
        %760 = vmatpush.xpose.msra.mxu0 0.0
        %761 = vmatpush.xpose.msra.mxu0 0.0
        %762 = vmatpush.xpose.msra.mxu0 0.0
        %763 = vmatpush.xpose.msra.mxu0 0.0
        %764 = vmatpush.xpose.msra.mxu0 0.0
        %765 = vmatpush.xpose.msra.mxu0 %v515
        %766 = vmatmul.f32.gmra.mxu0 %v748
        %v767 = vpop.f32.mrf.mxu0
        %v768 = vadd.f32 0.0, %v767
        %769 = vdwg.mxu0
        %v771 = vsel %vm495, %v583, 0
        %773 = vmatpush.xpose.msra.mxu0 0.0
        %774 = vmatpush.xpose.msra.mxu0 0.0
        %775 = vmatpush.xpose.msra.mxu0 0.0
        %776 = vmatpush.xpose.msra.mxu0 0.0
        %777 = vmatpush.xpose.msra.mxu0 0.0
        %778 = vmatpush.xpose.msra.mxu0 0.0
        %779 = vmatpush.xpose.msra.mxu0 0.0
        %780 = vmatpush.xpose.msra.mxu0 0.0
        %781 = vmatpush.xpose.msra.mxu0 0.0
        %782 = vmatpush.xpose.msra.mxu0 0.0
        %783 = vmatpush.xpose.msra.mxu0 0.0
        %784 = vmatpush.xpose.msra.mxu0 0.0
        %785 = vmatpush.xpose.msra.mxu0 0.0
        %786 = vmatpush.xpose.msra.mxu0 0.0
        %787 = vmatpush.xpose.msra.mxu0 0.0
        %788 = vmatpush.xpose.msra.mxu0 %v518
        %789 = vmatmul.f32.gmra.mxu0 %v771
        %v790 = vpop.f32.mrf.mxu0
        %v791 = vadd.f32 0.0, %v790
        %792 = vdwg.mxu0
        %v794 = vsel %vm495, %v586, 0
        %796 = vmatpush.xpose.msra.mxu0 0.0
        %797 = vmatpush.xpose.msra.mxu0 0.0
        %798 = vmatpush.xpose.msra.mxu0 0.0
        %799 = vmatpush.xpose.msra.mxu0 0.0
        %800 = vmatpush.xpose.msra.mxu0 0.0
        %801 = vmatpush.xpose.msra.mxu0 0.0
        %802 = vmatpush.xpose.msra.mxu0 0.0
        %803 = vmatpush.xpose.msra.mxu0 0.0
        %804 = vmatpush.xpose.msra.mxu0 0.0
        %805 = vmatpush.xpose.msra.mxu0 0.0
        %806 = vmatpush.xpose.msra.mxu0 0.0
        %807 = vmatpush.xpose.msra.mxu0 0.0
        %808 = vmatpush.xpose.msra.mxu0 0.0
        %809 = vmatpush.xpose.msra.mxu0 0.0
        %810 = vmatpush.xpose.msra.mxu0 0.0
        %811 = vmatpush.xpose.msra.mxu0 %v521
        %812 = vmatmul.f32.gmra.mxu0 %v794
        %v813 = vpop.f32.mrf.mxu0
        %v814 = vadd.f32 0.0, %v813
        %815 = vdwg.mxu0
        %v817 = vsel %vm495, %v589, 0
        %819 = vmatpush.xpose.msra.mxu0 0.0
        %820 = vmatpush.xpose.msra.mxu0 0.0
        %821 = vmatpush.xpose.msra.mxu0 0.0
        %822 = vmatpush.xpose.msra.mxu0 0.0
        %823 = vmatpush.xpose.msra.mxu0 0.0
        %824 = vmatpush.xpose.msra.mxu0 0.0
        %825 = vmatpush.xpose.msra.mxu0 0.0
        %826 = vmatpush.xpose.msra.mxu0 0.0
        %827 = vmatpush.xpose.msra.mxu0 0.0
        %828 = vmatpush.xpose.msra.mxu0 0.0
        %829 = vmatpush.xpose.msra.mxu0 0.0
        %830 = vmatpush.xpose.msra.mxu0 0.0
        %831 = vmatpush.xpose.msra.mxu0 0.0
        %832 = vmatpush.xpose.msra.mxu0 0.0
        %833 = vmatpush.xpose.msra.mxu0 0.0
        %834 = vmatpush.xpose.msra.mxu0 %v524
        %835 = vmatmul.f32.gmra.mxu0 %v817
        %v836 = vpop.f32.mrf.mxu0
        %v837 = vadd.f32 0.0, %v836
        %838 = vdwg.mxu0
        %v840 = vsel %vm495, %v592, 0
        %842 = vmatpush.xpose.msra.mxu0 0.0
        %843 = vmatpush.xpose.msra.mxu0 0.0
        %844 = vmatpush.xpose.msra.mxu0 0.0
        %845 = vmatpush.xpose.msra.mxu0 0.0
        %846 = vmatpush.xpose.msra.mxu0 0.0
        %847 = vmatpush.xpose.msra.mxu0 0.0
        %848 = vmatpush.xpose.msra.mxu0 0.0
        %849 = vmatpush.xpose.msra.mxu0 0.0
        %850 = vmatpush.xpose.msra.mxu0 0.0
        %851 = vmatpush.xpose.msra.mxu0 0.0
        %852 = vmatpush.xpose.msra.mxu0 0.0
        %853 = vmatpush.xpose.msra.mxu0 0.0
        %854 = vmatpush.xpose.msra.mxu0 0.0
        %855 = vmatpush.xpose.msra.mxu0 0.0
        %856 = vmatpush.xpose.msra.mxu0 0.0
        %857 = vmatpush.xpose.msra.mxu0 %v527
        %858 = vmatmul.f32.gmra.mxu0 %v840
        %v859 = vpop.f32.mrf.mxu0
        %v860 = vadd.f32 0.0, %v859
        %861 = vdwg.mxu0
        %v863 = vsel %vm495, %v595, 0
        %865 = vmatpush.xpose.msra.mxu0 0.0
        %866 = vmatpush.xpose.msra.mxu0 0.0
        %867 = vmatpush.xpose.msra.mxu0 0.0
        %868 = vmatpush.xpose.msra.mxu0 0.0
        %869 = vmatpush.xpose.msra.mxu0 0.0
        %870 = vmatpush.xpose.msra.mxu0 0.0
        %871 = vmatpush.xpose.msra.mxu0 0.0
        %872 = vmatpush.xpose.msra.mxu0 0.0
        %873 = vmatpush.xpose.msra.mxu0 0.0
        %874 = vmatpush.xpose.msra.mxu0 0.0
        %875 = vmatpush.xpose.msra.mxu0 0.0
        %876 = vmatpush.xpose.msra.mxu0 0.0
        %877 = vmatpush.xpose.msra.mxu0 0.0
        %878 = vmatpush.xpose.msra.mxu0 0.0
        %879 = vmatpush.xpose.msra.mxu0 0.0
        %880 = vmatpush.xpose.msra.mxu0 %v530
        %881 = vmatmul.f32.gmra.mxu0 %v863
        %v882 = vpop.f32.mrf.mxu0
        %v883 = vadd.f32 0.0, %v882
        %884 = vdwg.mxu0
        %v886 = vsel %vm495, %v598, 0
        %888 = vmatpush.xpose.msra.mxu0 0.0
        %889 = vmatpush.xpose.msra.mxu0 0.0
        %890 = vmatpush.xpose.msra.mxu0 0.0
        %891 = vmatpush.xpose.msra.mxu0 0.0
        %892 = vmatpush.xpose.msra.mxu0 0.0
        %893 = vmatpush.xpose.msra.mxu0 0.0
        %894 = vmatpush.xpose.msra.mxu0 0.0
        %895 = vmatpush.xpose.msra.mxu0 0.0
        %896 = vmatpush.xpose.msra.mxu0 0.0
        %897 = vmatpush.xpose.msra.mxu0 0.0
        %898 = vmatpush.xpose.msra.mxu0 0.0
        %899 = vmatpush.xpose.msra.mxu0 0.0
        %900 = vmatpush.xpose.msra.mxu0 0.0
        %901 = vmatpush.xpose.msra.mxu0 0.0
        %902 = vmatpush.xpose.msra.mxu0 0.0
        %903 = vmatpush.xpose.msra.mxu0 %v533
        %904 = vmatmul.f32.gmra.mxu0 %v886
        %v905 = vpop.f32.mrf.mxu0
        %v906 = vadd.f32 0.0, %v905
        %907 = vdwg.mxu0
        %v909 = vsel %vm495, %v601, 0
        %911 = vmatpush.xpose.msra.mxu0 0.0
        %912 = vmatpush.xpose.msra.mxu0 0.0
        %913 = vmatpush.xpose.msra.mxu0 0.0
        %914 = vmatpush.xpose.msra.mxu0 0.0
        %915 = vmatpush.xpose.msra.mxu0 0.0
        %916 = vmatpush.xpose.msra.mxu0 0.0
        %917 = vmatpush.xpose.msra.mxu0 0.0
        %918 = vmatpush.xpose.msra.mxu0 0.0
        %919 = vmatpush.xpose.msra.mxu0 0.0
        %920 = vmatpush.xpose.msra.mxu0 0.0
        %921 = vmatpush.xpose.msra.mxu0 0.0
        %922 = vmatpush.xpose.msra.mxu0 0.0
        %923 = vmatpush.xpose.msra.mxu0 0.0
        %924 = vmatpush.xpose.msra.mxu0 0.0
        %925 = vmatpush.xpose.msra.mxu0 0.0
        %926 = vmatpush.xpose.msra.mxu0 %v536
        %927 = vmatmul.f32.gmra.mxu0 %v909
        %v928 = vpop.f32.mrf.mxu0
        %v929 = vadd.f32 0.0, %v928
        %930 = vdwg.mxu0
        %v932 = vsel %vm495, %v604, 0
        %934 = vmatpush.xpose.msra.mxu0 0.0
        %935 = vmatpush.xpose.msra.mxu0 0.0
        %936 = vmatpush.xpose.msra.mxu0 0.0
        %937 = vmatpush.xpose.msra.mxu0 0.0
        %938 = vmatpush.xpose.msra.mxu0 0.0
        %939 = vmatpush.xpose.msra.mxu0 0.0
        %940 = vmatpush.xpose.msra.mxu0 0.0
        %941 = vmatpush.xpose.msra.mxu0 0.0
        %942 = vmatpush.xpose.msra.mxu0 0.0
        %943 = vmatpush.xpose.msra.mxu0 0.0
        %944 = vmatpush.xpose.msra.mxu0 0.0
        %945 = vmatpush.xpose.msra.mxu0 0.0
        %946 = vmatpush.xpose.msra.mxu0 0.0
        %947 = vmatpush.xpose.msra.mxu0 0.0
        %948 = vmatpush.xpose.msra.mxu0 0.0
        %949 = vmatpush.xpose.msra.mxu0 %v539
        %950 = vmatmul.f32.gmra.mxu0 %v932
        %v951 = vpop.f32.mrf.mxu0
        %v952 = vadd.f32 0.0, %v951
        %953 = vdwg.mxu0
        %v955 = vsel %vm495, %v607, 0
        %957 = vmatpush.xpose.msra.mxu0 0.0
        %958 = vmatpush.xpose.msra.mxu0 0.0
        %959 = vmatpush.xpose.msra.mxu0 0.0
        %960 = vmatpush.xpose.msra.mxu0 0.0
        %961 = vmatpush.xpose.msra.mxu0 0.0
        %962 = vmatpush.xpose.msra.mxu0 0.0
        %963 = vmatpush.xpose.msra.mxu0 0.0
        %964 = vmatpush.xpose.msra.mxu0 0.0
        %965 = vmatpush.xpose.msra.mxu0 0.0
        %966 = vmatpush.xpose.msra.mxu0 0.0
        %967 = vmatpush.xpose.msra.mxu0 0.0
        %968 = vmatpush.xpose.msra.mxu0 0.0
        %969 = vmatpush.xpose.msra.mxu0 0.0
        %970 = vmatpush.xpose.msra.mxu0 0.0
        %971 = vmatpush.xpose.msra.mxu0 0.0
        %972 = vmatpush.xpose.msra.mxu0 %v542
        %973 = vmatmul.f32.gmra.mxu0 %v955
        %v974 = vpop.f32.mrf.mxu0
        %v975 = vadd.f32 0.0, %v974
        %976 = vdwg.mxu0
        %v977 = vlaneseq
        %v978 = vand.u32 %v977, 127
        %v979 = vperm.slane %v473, 0
        %v980 = vperm.slane %v477, 0
        %v981 = vperm.slane %v478, 0
        %v982 = vperm.slane %v479, 0
        %v983 = vperm.slane %v480, 0
        %v984 = vperm.slane %v481, 0
        %v985 = vperm.slane %v482, 0
        %v986 = vperm.slane %v483, 0
        %v987 = vperm.slane %v474, 0
        %v988 = vperm.slane %v484, 0
        %v989 = vperm.slane %v485, 0
        %v990 = vperm.slane %v486, 0
        %v991 = vperm.slane %v487, 0
        %v992 = vperm.slane %v488, 0
        %v993 = vperm.slane %v489, 0
        %v994 = vperm.slane %v490, 0
        %995 = vset.pattern.permute.xlu0 0
        %996 = vperm.xlu0 %995, %v979
        %v997 = vpop.permute.xlu0 %996
        %998 = vset.pattern.permute.xlu0 0
        %999 = vperm.xlu0 %998, %v980
        %v1000 = vpop.permute.xlu0 %999
        %1001 = vset.pattern.permute.xlu0 0
        %1002 = vperm.xlu0 %1001, %v981
        %v1003 = vpop.permute.xlu0 %1002
        %1004 = vset.pattern.permute.xlu0 0
        %1005 = vperm.xlu0 %1004, %v982
        %v1006 = vpop.permute.xlu0 %1005
        %1007 = vset.pattern.permute.xlu0 0
        %1008 = vperm.xlu0 %1007, %v983
        %v1009 = vpop.permute.xlu0 %1008
        %1010 = vset.pattern.permute.xlu0 0
        %1011 = vperm.xlu0 %1010, %v984
        %v1012 = vpop.permute.xlu0 %1011
        %1013 = vset.pattern.permute.xlu0 0
        %1014 = vperm.xlu0 %1013, %v985
        %v1015 = vpop.permute.xlu0 %1014
        %1016 = vset.pattern.permute.xlu0 0
        %1017 = vperm.xlu0 %1016, %v986
        %v1018 = vpop.permute.xlu0 %1017
        %1019 = vset.pattern.permute.xlu0 0
        %1020 = vperm.xlu0 %1019, %v987
        %v1021 = vpop.permute.xlu0 %1020
        %1022 = vset.pattern.permute.xlu0 0
        %1023 = vperm.xlu0 %1022, %v988
        %v1024 = vpop.permute.xlu0 %1023
        %1025 = vset.pattern.permute.xlu0 0
        %1026 = vperm.xlu0 %1025, %v989
        %v1027 = vpop.permute.xlu0 %1026
        %1028 = vset.pattern.permute.xlu0 0
        %1029 = vperm.xlu0 %1028, %v990
        %v1030 = vpop.permute.xlu0 %1029
        %1031 = vset.pattern.permute.xlu0 0
        %1032 = vperm.xlu0 %1031, %v991
        %v1033 = vpop.permute.xlu0 %1032
        %1034 = vset.pattern.permute.xlu0 0
        %1035 = vperm.xlu0 %1034, %v992
        %v1036 = vpop.permute.xlu0 %1035
        %1037 = vset.pattern.permute.xlu0 0
        %1038 = vperm.xlu0 %1037, %v993
        %v1039 = vpop.permute.xlu0 %1038
        %1040 = vset.pattern.permute.xlu0 0
        %1041 = vperm.xlu0 %1040, %v994
        %v1042 = vpop.permute.xlu0 %1041
        %vm1043 = vcmp.lt.s32.totalorder %v978, %v997
        %vm1044 = vcmp.lt.s32.totalorder %v978, %v1000
        %vm1045 = vcmp.lt.s32.totalorder %v978, %v1003
        %vm1046 = vcmp.lt.s32.totalorder %v978, %v1006
        %vm1047 = vcmp.lt.s32.totalorder %v978, %v1009
        %vm1048 = vcmp.lt.s32.totalorder %v978, %v1012
        %vm1049 = vcmp.lt.s32.totalorder %v978, %v1015
        %vm1050 = vcmp.lt.s32.totalorder %v978, %v1018
        %vm1051 = vcmp.lt.s32.totalorder %v978, %v1021
        %vm1052 = vcmp.lt.s32.totalorder %v978, %v1024
        %vm1053 = vcmp.lt.s32.totalorder %v978, %v1027
        %vm1054 = vcmp.lt.s32.totalorder %v978, %v1030
        %vm1055 = vcmp.lt.s32.totalorder %v978, %v1033
        %vm1056 = vcmp.lt.s32.totalorder %v978, %v1036
        %vm1057 = vcmp.lt.s32.totalorder %v978, %v1039
        %vm1058 = vcmp.lt.s32.totalorder %v978, %v1042
        %vm1059 = vcmp.gt.f32.partialorder %v457, 0.0
        %vm1060 = vcmp.gt.f32.partialorder %v458, 0.0
        %vm1061 = vcmp.gt.f32.partialorder %v459, 0.0
        %vm1062 = vcmp.gt.f32.partialorder %v460, 0.0
        %vm1063 = vcmp.gt.f32.partialorder %v461, 0.0
        %vm1064 = vcmp.gt.f32.partialorder %v462, 0.0
        %vm1065 = vcmp.gt.f32.partialorder %v463, 0.0
        %vm1066 = vcmp.gt.f32.partialorder %v464, 0.0
        %vm1067 = vcmp.gt.f32.partialorder %v465, 0.0
        %vm1068 = vcmp.gt.f32.partialorder %v466, 0.0
        %vm1069 = vcmp.gt.f32.partialorder %v467, 0.0
        %vm1070 = vcmp.gt.f32.partialorder %v468, 0.0
        %vm1071 = vcmp.gt.f32.partialorder %v469, 0.0
        %vm1072 = vcmp.gt.f32.partialorder %v470, 0.0
        %vm1073 = vcmp.gt.f32.partialorder %v471, 0.0
        %vm1074 = vcmp.gt.f32.partialorder %v472, 0.0
        %vm1075 = vmand %vm1043, %vm1059
        %vm1076 = vmand %vm1044, %vm1060
        %vm1077 = vmand %vm1045, %vm1061
        %vm1078 = vmand %vm1046, %vm1062
        %vm1079 = vmand %vm1047, %vm1063
        %vm1080 = vmand %vm1048, %vm1064
        %vm1081 = vmand %vm1049, %vm1065
        %vm1082 = vmand %vm1050, %vm1066
        %vm1083 = vmand %vm1051, %vm1067
        %vm1084 = vmand %vm1052, %vm1068
        %vm1085 = vmand %vm1053, %vm1069
        %vm1086 = vmand %vm1054, %vm1070
        %vm1087 = vmand %vm1055, %vm1071
        %vm1088 = vmand %vm1056, %vm1072
        %vm1089 = vmand %vm1057, %vm1073
        %vm1090 = vmand %vm1058, %vm1074
        %v1091 = vsel %vm1075, %v630, -1e+09
        %v1092 = vsel %vm1076, %v653, -1e+09
        %v1093 = vsel %vm1077, %v676, -1e+09
        %v1094 = vsel %vm1078, %v699, -1e+09
        %v1095 = vsel %vm1079, %v722, -1e+09
        %v1096 = vsel %vm1080, %v745, -1e+09
        %v1097 = vsel %vm1081, %v768, -1e+09
        %v1098 = vsel %vm1082, %v791, -1e+09
        %v1099 = vsel %vm1083, %v814, -1e+09
        %v1100 = vsel %vm1084, %v837, -1e+09
        %v1101 = vsel %vm1085, %v860, -1e+09
        %v1102 = vsel %vm1086, %v883, -1e+09
        %v1103 = vsel %vm1087, %v906, -1e+09
        %v1104 = vsel %vm1088, %v929, -1e+09
        %v1105 = vsel %vm1089, %v952, -1e+09
        %v1106 = vsel %vm1090, %v975, -1e+09
        %vm1107 = vcmask 64512
        %v1108 = vsel %vm1107, %v1091, -inf
        %1109 = vmax.xlane.f32.xlu0 %v1108
        %v1110 = vpop.xlane.xlu0 %1109
        %v1111 = vsel %vm1107, %v1092, -inf
        %1112 = vmax.xlane.f32.xlu0 %v1111
        %v1113 = vpop.xlane.xlu0 %1112
        %v1114 = vsel %vm1107, %v1093, -inf
        %1115 = vmax.xlane.f32.xlu0 %v1114
        %v1116 = vpop.xlane.xlu0 %1115
        %v1117 = vsel %vm1107, %v1094, -inf
        %1118 = vmax.xlane.f32.xlu0 %v1117
        %v1119 = vpop.xlane.xlu0 %1118
        %v1120 = vsel %vm1107, %v1095, -inf
        %1121 = vmax.xlane.f32.xlu0 %v1120
        %v1122 = vpop.xlane.xlu0 %1121
        %v1123 = vsel %vm1107, %v1096, -inf
        %1124 = vmax.xlane.f32.xlu0 %v1123
        %v1125 = vpop.xlane.xlu0 %1124
        %v1126 = vsel %vm1107, %v1097, -inf
        %1127 = vmax.xlane.f32.xlu0 %v1126
        %v1128 = vpop.xlane.xlu0 %1127
        %v1129 = vsel %vm1107, %v1098, -inf
        %1130 = vmax.xlane.f32.xlu0 %v1129
        %v1131 = vpop.xlane.xlu0 %1130
        %v1132 = vsel %vm1107, %v1099, -inf
        %1133 = vmax.xlane.f32.xlu0 %v1132
        %v1134 = vpop.xlane.xlu0 %1133
        %v1135 = vsel %vm1107, %v1100, -inf
        %1136 = vmax.xlane.f32.xlu0 %v1135
        %v1137 = vpop.xlane.xlu0 %1136
        %v1138 = vsel %vm1107, %v1101, -inf
        %1139 = vmax.xlane.f32.xlu0 %v1138
        %v1140 = vpop.xlane.xlu0 %1139
        %v1141 = vsel %vm1107, %v1102, -inf
        %1142 = vmax.xlane.f32.xlu0 %v1141
        %v1143 = vpop.xlane.xlu0 %1142
        %v1144 = vsel %vm1107, %v1103, -inf
        %1145 = vmax.xlane.f32.xlu0 %v1144
        %v1146 = vpop.xlane.xlu0 %1145
        %v1147 = vsel %vm1107, %v1104, -inf
        %1148 = vmax.xlane.f32.xlu0 %v1147
        %v1149 = vpop.xlane.xlu0 %1148
        %v1150 = vsel %vm1107, %v1105, -inf
        %1151 = vmax.xlane.f32.xlu0 %v1150
        %v1152 = vpop.xlane.xlu0 %1151
        %v1153 = vsel %vm1107, %v1106, -inf
        %1154 = vmax.xlane.f32.xlu0 %v1153
        %v1155 = vpop.xlane.xlu0 %1154
        %v1156 = vsub.f32 %v1091, %v1110
        %v1157 = vsub.f32 %v1092, %v1113
        %v1158 = vsub.f32 %v1093, %v1116
        %v1159 = vsub.f32 %v1094, %v1119
        %v1160 = vsub.f32 %v1095, %v1122
        %v1161 = vsub.f32 %v1096, %v1125
        %v1162 = vsub.f32 %v1097, %v1128
        %v1163 = vsub.f32 %v1098, %v1131
        %v1164 = vsub.f32 %v1099, %v1134
        %v1165 = vsub.f32 %v1100, %v1137
        %v1166 = vsub.f32 %v1101, %v1140
        %v1167 = vsub.f32 %v1102, %v1143
        %v1168 = vsub.f32 %v1103, %v1146
        %v1169 = vsub.f32 %v1104, %v1149
        %v1170 = vsub.f32 %v1105, %v1152
        %v1171 = vsub.f32 %v1106, %v1155
        %v1172 = vmul.f32 %v1156, 1.442695
        %v1173 = vpow.pop %v1172
        %v1174 = vmul.f32 %v1157, 1.442695
        %v1175 = vpow.pop %v1174
        %v1176 = vmul.f32 %v1158, 1.442695
        %v1177 = vpow.pop %v1176
        %v1178 = vmul.f32 %v1159, 1.442695
        %v1179 = vpow.pop %v1178
        %v1180 = vmul.f32 %v1160, 1.442695
        %v1181 = vpow.pop %v1180
        %v1182 = vmul.f32 %v1161, 1.442695
        %v1183 = vpow.pop %v1182
        %v1184 = vmul.f32 %v1162, 1.442695
        %v1185 = vpow.pop %v1184
        %v1186 = vmul.f32 %v1163, 1.442695
        %v1187 = vpow.pop %v1186
        %v1188 = vmul.f32 %v1164, 1.442695
        %v1189 = vpow.pop %v1188
        %v1190 = vmul.f32 %v1165, 1.442695
        %v1191 = vpow.pop %v1190
        %v1192 = vmul.f32 %v1166, 1.442695
        %v1193 = vpow.pop %v1192
        %v1194 = vmul.f32 %v1167, 1.442695
        %v1195 = vpow.pop %v1194
        %v1196 = vmul.f32 %v1168, 1.442695
        %v1197 = vpow.pop %v1196
        %v1198 = vmul.f32 %v1169, 1.442695
        %v1199 = vpow.pop %v1198
        %v1200 = vmul.f32 %v1170, 1.442695
        %v1201 = vpow.pop %v1200
        %v1202 = vmul.f32 %v1171, 1.442695
        %v1203 = vpow.pop %v1202
        %v1204 = vsel %vm1107, %v1173, 0.0
        %1205 = vadd.xlane.f32.xlu0 %v1204
        %v1206 = vpop.xlane.xlu0 %1205
        %v1207 = vsel %vm1107, %v1175, 0.0
        %1208 = vadd.xlane.f32.xlu0 %v1207
        %v1209 = vpop.xlane.xlu0 %1208
        %v1210 = vsel %vm1107, %v1177, 0.0
        %1211 = vadd.xlane.f32.xlu0 %v1210
        %v1212 = vpop.xlane.xlu0 %1211
        %v1213 = vsel %vm1107, %v1179, 0.0
        %1214 = vadd.xlane.f32.xlu0 %v1213
        %v1215 = vpop.xlane.xlu0 %1214
        %v1216 = vsel %vm1107, %v1181, 0.0
        %1217 = vadd.xlane.f32.xlu0 %v1216
        %v1218 = vpop.xlane.xlu0 %1217
        %v1219 = vsel %vm1107, %v1183, 0.0
        %1220 = vadd.xlane.f32.xlu0 %v1219
        %v1221 = vpop.xlane.xlu0 %1220
        %v1222 = vsel %vm1107, %v1185, 0.0
        %1223 = vadd.xlane.f32.xlu0 %v1222
        %v1224 = vpop.xlane.xlu0 %1223
        %v1225 = vsel %vm1107, %v1187, 0.0
        %1226 = vadd.xlane.f32.xlu0 %v1225
        %v1227 = vpop.xlane.xlu0 %1226
        %v1228 = vsel %vm1107, %v1189, 0.0
        %1229 = vadd.xlane.f32.xlu0 %v1228
        %v1230 = vpop.xlane.xlu0 %1229
        %v1231 = vsel %vm1107, %v1191, 0.0
        %1232 = vadd.xlane.f32.xlu0 %v1231
        %v1233 = vpop.xlane.xlu0 %1232
        %v1234 = vsel %vm1107, %v1193, 0.0
        %1235 = vadd.xlane.f32.xlu0 %v1234
        %v1236 = vpop.xlane.xlu0 %1235
        %v1237 = vsel %vm1107, %v1195, 0.0
        %1238 = vadd.xlane.f32.xlu0 %v1237
        %v1239 = vpop.xlane.xlu0 %1238
        %v1240 = vsel %vm1107, %v1197, 0.0
        %1241 = vadd.xlane.f32.xlu0 %v1240
        %v1242 = vpop.xlane.xlu0 %1241
        %v1243 = vsel %vm1107, %v1199, 0.0
        %1244 = vadd.xlane.f32.xlu0 %v1243
        %v1245 = vpop.xlane.xlu0 %1244
        %v1246 = vsel %vm1107, %v1201, 0.0
        %1247 = vadd.xlane.f32.xlu0 %v1246
        %v1248 = vpop.xlane.xlu0 %1247
        %v1249 = vsel %vm1107, %v1203, 0.0
        %1250 = vadd.xlane.f32.xlu0 %v1249
        %v1251 = vpop.xlane.xlu0 %1250
        %v1252 = vrcp.pop %v1206
        %v1253 = vmul.f32 %v1206, %v1252
        %v1254 = vsub.f32 1.0, %v1253
        %v1255 = vmul.f32 %v1252, %v1254
        %v1256 = vadd.f32 %v1252, %v1255
        %vm1257 = vweird.f32 %v1206
        %vm1258 = vweird.f32 %v1252
        %vm1259 = vmor %vm1257, %vm1258
        %v1260 = vsel %vm1259, %v1252, %v1256
        %v1261 = vand.u32 2147483647, %v1206
        %vm1262 = vcmp.eq.f32.partialorder %v1261, 8.507059e+37
        %v1263 = vand.u32 %v1206, 2147483648
        %v1264 = vor.u32 1.1754944e-38, %v1263
        %v1265 = vsel %vm1262, %v1264, %v1260
        %v1266 = vrcp.pop %v1209
        %v1267 = vmul.f32 %v1209, %v1266
        %v1268 = vsub.f32 1.0, %v1267
        %v1269 = vmul.f32 %v1266, %v1268
        %v1270 = vadd.f32 %v1266, %v1269
        %vm1271 = vweird.f32 %v1209
        %vm1272 = vweird.f32 %v1266
        %vm1273 = vmor %vm1271, %vm1272
        %v1274 = vsel %vm1273, %v1266, %v1270
        %v1275 = vand.u32 2147483647, %v1209
        %vm1276 = vcmp.eq.f32.partialorder %v1275, 8.507059e+37
        %v1277 = vand.u32 %v1209, 2147483648
        %v1278 = vor.u32 1.1754944e-38, %v1277
        %v1279 = vsel %vm1276, %v1278, %v1274
        %v1280 = vrcp.pop %v1212
        %v1281 = vmul.f32 %v1212, %v1280
        %v1282 = vsub.f32 1.0, %v1281
        %v1283 = vmul.f32 %v1280, %v1282
        %v1284 = vadd.f32 %v1280, %v1283
        %vm1285 = vweird.f32 %v1212
        %vm1286 = vweird.f32 %v1280
        %vm1287 = vmor %vm1285, %vm1286
        %v1288 = vsel %vm1287, %v1280, %v1284
        %v1289 = vand.u32 2147483647, %v1212
        %vm1290 = vcmp.eq.f32.partialorder %v1289, 8.507059e+37
        %v1291 = vand.u32 %v1212, 2147483648
        %v1292 = vor.u32 1.1754944e-38, %v1291
        %v1293 = vsel %vm1290, %v1292, %v1288
        %v1294 = vrcp.pop %v1215
        %v1295 = vmul.f32 %v1215, %v1294
        %v1296 = vsub.f32 1.0, %v1295
        %v1297 = vmul.f32 %v1294, %v1296
        %v1298 = vadd.f32 %v1294, %v1297
        %vm1299 = vweird.f32 %v1215
        %vm1300 = vweird.f32 %v1294
        %vm1301 = vmor %vm1299, %vm1300
        %v1302 = vsel %vm1301, %v1294, %v1298
        %v1303 = vand.u32 2147483647, %v1215
        %vm1304 = vcmp.eq.f32.partialorder %v1303, 8.507059e+37
        %v1305 = vand.u32 %v1215, 2147483648
        %v1306 = vor.u32 1.1754944e-38, %v1305
        %v1307 = vsel %vm1304, %v1306, %v1302
        %v1308 = vrcp.pop %v1218
        %v1309 = vmul.f32 %v1218, %v1308
        %v1310 = vsub.f32 1.0, %v1309
        %v1311 = vmul.f32 %v1308, %v1310
        %v1312 = vadd.f32 %v1308, %v1311
        %vm1313 = vweird.f32 %v1218
        %vm1314 = vweird.f32 %v1308
        %vm1315 = vmor %vm1313, %vm1314
        %v1316 = vsel %vm1315, %v1308, %v1312
        %v1317 = vand.u32 2147483647, %v1218
        %vm1318 = vcmp.eq.f32.partialorder %v1317, 8.507059e+37
        %v1319 = vand.u32 %v1218, 2147483648
        %v1320 = vor.u32 1.1754944e-38, %v1319
        %v1321 = vsel %vm1318, %v1320, %v1316
        %v1322 = vrcp.pop %v1221
        %v1323 = vmul.f32 %v1221, %v1322
        %v1324 = vsub.f32 1.0, %v1323
        %v1325 = vmul.f32 %v1322, %v1324
        %v1326 = vadd.f32 %v1322, %v1325
        %vm1327 = vweird.f32 %v1221
        %vm1328 = vweird.f32 %v1322
        %vm1329 = vmor %vm1327, %vm1328
        %v1330 = vsel %vm1329, %v1322, %v1326
        %v1331 = vand.u32 2147483647, %v1221
        %vm1332 = vcmp.eq.f32.partialorder %v1331, 8.507059e+37
        %v1333 = vand.u32 %v1221, 2147483648
        %v1334 = vor.u32 1.1754944e-38, %v1333
        %v1335 = vsel %vm1332, %v1334, %v1330
        %v1336 = vrcp.pop %v1224
        %v1337 = vmul.f32 %v1224, %v1336
        %v1338 = vsub.f32 1.0, %v1337
        %v1339 = vmul.f32 %v1336, %v1338
        %v1340 = vadd.f32 %v1336, %v1339
        %vm1341 = vweird.f32 %v1224
        %vm1342 = vweird.f32 %v1336
        %vm1343 = vmor %vm1341, %vm1342
        %v1344 = vsel %vm1343, %v1336, %v1340
        %v1345 = vand.u32 2147483647, %v1224
        %vm1346 = vcmp.eq.f32.partialorder %v1345, 8.507059e+37
        %v1347 = vand.u32 %v1224, 2147483648
        %v1348 = vor.u32 1.1754944e-38, %v1347
        %v1349 = vsel %vm1346, %v1348, %v1344
        %v1350 = vrcp.pop %v1227
        %v1351 = vmul.f32 %v1227, %v1350
        %v1352 = vsub.f32 1.0, %v1351
        %v1353 = vmul.f32 %v1350, %v1352
        %v1354 = vadd.f32 %v1350, %v1353
        %vm1355 = vweird.f32 %v1227
        %vm1356 = vweird.f32 %v1350
        %vm1357 = vmor %vm1355, %vm1356
        %v1358 = vsel %vm1357, %v1350, %v1354
        %v1359 = vand.u32 2147483647, %v1227
        %vm1360 = vcmp.eq.f32.partialorder %v1359, 8.507059e+37
        %v1361 = vand.u32 %v1227, 2147483648
        %v1362 = vor.u32 1.1754944e-38, %v1361
        %v1363 = vsel %vm1360, %v1362, %v1358
        %v1364 = vrcp.pop %v1230
        %v1365 = vmul.f32 %v1230, %v1364
        %v1366 = vsub.f32 1.0, %v1365
        %v1367 = vmul.f32 %v1364, %v1366
        %v1368 = vadd.f32 %v1364, %v1367
        %vm1369 = vweird.f32 %v1230
        %vm1370 = vweird.f32 %v1364
        %vm1371 = vmor %vm1369, %vm1370
        %v1372 = vsel %vm1371, %v1364, %v1368
        %v1373 = vand.u32 2147483647, %v1230
        %vm1374 = vcmp.eq.f32.partialorder %v1373, 8.507059e+37
        %v1375 = vand.u32 %v1230, 2147483648
        %v1376 = vor.u32 1.1754944e-38, %v1375
        %v1377 = vsel %vm1374, %v1376, %v1372
        %v1378 = vrcp.pop %v1233
        %v1379 = vmul.f32 %v1233, %v1378
        %v1380 = vsub.f32 1.0, %v1379
        %v1381 = vmul.f32 %v1378, %v1380
        %v1382 = vadd.f32 %v1378, %v1381
        %vm1383 = vweird.f32 %v1233
        %vm1384 = vweird.f32 %v1378
        %vm1385 = vmor %vm1383, %vm1384
        %v1386 = vsel %vm1385, %v1378, %v1382
        %v1387 = vand.u32 2147483647, %v1233
        %vm1388 = vcmp.eq.f32.partialorder %v1387, 8.507059e+37
        %v1389 = vand.u32 %v1233, 2147483648
        %v1390 = vor.u32 1.1754944e-38, %v1389
        %v1391 = vsel %vm1388, %v1390, %v1386
        %v1392 = vrcp.pop %v1236
        %v1393 = vmul.f32 %v1236, %v1392
        %v1394 = vsub.f32 1.0, %v1393
        %v1395 = vmul.f32 %v1392, %v1394
        %v1396 = vadd.f32 %v1392, %v1395
        %vm1397 = vweird.f32 %v1236
        %vm1398 = vweird.f32 %v1392
        %vm1399 = vmor %vm1397, %vm1398
        %v1400 = vsel %vm1399, %v1392, %v1396
        %v1401 = vand.u32 2147483647, %v1236
        %vm1402 = vcmp.eq.f32.partialorder %v1401, 8.507059e+37
        %v1403 = vand.u32 %v1236, 2147483648
        %v1404 = vor.u32 1.1754944e-38, %v1403
        %v1405 = vsel %vm1402, %v1404, %v1400
        %v1406 = vrcp.pop %v1239
        %v1407 = vmul.f32 %v1239, %v1406
        %v1408 = vsub.f32 1.0, %v1407
        %v1409 = vmul.f32 %v1406, %v1408
        %v1410 = vadd.f32 %v1406, %v1409
        %vm1411 = vweird.f32 %v1239
        %vm1412 = vweird.f32 %v1406
        %vm1413 = vmor %vm1411, %vm1412
        %v1414 = vsel %vm1413, %v1406, %v1410
        %v1415 = vand.u32 2147483647, %v1239
        %vm1416 = vcmp.eq.f32.partialorder %v1415, 8.507059e+37
        %v1417 = vand.u32 %v1239, 2147483648
        %v1418 = vor.u32 1.1754944e-38, %v1417
        %v1419 = vsel %vm1416, %v1418, %v1414
        %v1420 = vrcp.pop %v1242
        %v1421 = vmul.f32 %v1242, %v1420
        %v1422 = vsub.f32 1.0, %v1421
        %v1423 = vmul.f32 %v1420, %v1422
        %v1424 = vadd.f32 %v1420, %v1423
        %vm1425 = vweird.f32 %v1242
        %vm1426 = vweird.f32 %v1420
        %vm1427 = vmor %vm1425, %vm1426
        %v1428 = vsel %vm1427, %v1420, %v1424
        %v1429 = vand.u32 2147483647, %v1242
        %vm1430 = vcmp.eq.f32.partialorder %v1429, 8.507059e+37
        %v1431 = vand.u32 %v1242, 2147483648
        %v1432 = vor.u32 1.1754944e-38, %v1431
        %v1433 = vsel %vm1430, %v1432, %v1428
        %v1434 = vrcp.pop %v1245
        %v1435 = vmul.f32 %v1245, %v1434
        %v1436 = vsub.f32 1.0, %v1435
        %v1437 = vmul.f32 %v1434, %v1436
        %v1438 = vadd.f32 %v1434, %v1437
        %vm1439 = vweird.f32 %v1245
        %vm1440 = vweird.f32 %v1434
        %vm1441 = vmor %vm1439, %vm1440
        %v1442 = vsel %vm1441, %v1434, %v1438
        %v1443 = vand.u32 2147483647, %v1245
        %vm1444 = vcmp.eq.f32.partialorder %v1443, 8.507059e+37
        %v1445 = vand.u32 %v1245, 2147483648
        %v1446 = vor.u32 1.1754944e-38, %v1445
        %v1447 = vsel %vm1444, %v1446, %v1442
        %v1448 = vrcp.pop %v1248
        %v1449 = vmul.f32 %v1248, %v1448
        %v1450 = vsub.f32 1.0, %v1449
        %v1451 = vmul.f32 %v1448, %v1450
        %v1452 = vadd.f32 %v1448, %v1451
        %vm1453 = vweird.f32 %v1248
        %vm1454 = vweird.f32 %v1448
        %vm1455 = vmor %vm1453, %vm1454
        %v1456 = vsel %vm1455, %v1448, %v1452
        %v1457 = vand.u32 2147483647, %v1248
        %vm1458 = vcmp.eq.f32.partialorder %v1457, 8.507059e+37
        %v1459 = vand.u32 %v1248, 2147483648
        %v1460 = vor.u32 1.1754944e-38, %v1459
        %v1461 = vsel %vm1458, %v1460, %v1456
        %v1462 = vrcp.pop %v1251
        %v1463 = vmul.f32 %v1251, %v1462
        %v1464 = vsub.f32 1.0, %v1463
        %v1465 = vmul.f32 %v1462, %v1464
        %v1466 = vadd.f32 %v1462, %v1465
        %vm1467 = vweird.f32 %v1251
        %vm1468 = vweird.f32 %v1462
        %vm1469 = vmor %vm1467, %vm1468
        %v1470 = vsel %vm1469, %v1462, %v1466
        %v1471 = vand.u32 2147483647, %v1251
        %vm1472 = vcmp.eq.f32.partialorder %v1471, 8.507059e+37
        %v1473 = vand.u32 %v1251, 2147483648
        %v1474 = vor.u32 1.1754944e-38, %v1473
        %v1475 = vsel %vm1472, %v1474, %v1470
        %v1476 = vmul.f32 %v1173, %v1265
        %v1477 = vmul.f32 %v1175, %v1279
        %v1478 = vmul.f32 %v1177, %v1293
        %v1479 = vmul.f32 %v1179, %v1307
        %v1480 = vmul.f32 %v1181, %v1321
        %v1481 = vmul.f32 %v1183, %v1335
        %v1482 = vmul.f32 %v1185, %v1349
        %v1483 = vmul.f32 %v1187, %v1363
        %v1484 = vmul.f32 %v1189, %v1377
        %v1485 = vmul.f32 %v1191, %v1391
        %v1486 = vmul.f32 %v1193, %v1405
        %v1487 = vmul.f32 %v1195, %v1419
        %v1488 = vmul.f32 %v1197, %v1433
        %v1489 = vmul.f32 %v1199, %v1447
        %v1490 = vmul.f32 %v1201, %v1461
        %v1491 = vmul.f32 %v1203, %v1475
        %1492 = vst.msk [vmem:[%s439] sm:$0xff] %vm1107, %v1476
        %1493 = vst.msk [vmem:[%s439 + $0x8] sm:$0xff] %vm1107, %v1477
        %1494 = vst.msk [vmem:[%s439 + $0x10] sm:$0xff] %vm1107, %v1478
        %1495 = vst.msk [vmem:[%s439 + $0x18] sm:$0xff] %vm1107, %v1479
        %1496 = vst.msk [vmem:[%s439 + $0x20] sm:$0xff] %vm1107, %v1480
        %1497 = vst.msk [vmem:[%s439 + $0x28] sm:$0xff] %vm1107, %v1481
        %1498 = vst.msk [vmem:[%s439 + $0x30] sm:$0xff] %vm1107, %v1482
        %1499 = vst.msk [vmem:[%s439 + $0x38] sm:$0xff] %vm1107, %v1483
        %1500 = vst.msk [vmem:[%s439 + $0x40] sm:$0xff] %vm1107, %v1484
        %1501 = vst.msk [vmem:[%s439 + $0x48] sm:$0xff] %vm1107, %v1485
        %1502 = vst.msk [vmem:[%s439 + $0x50] sm:$0xff] %vm1107, %v1486
        %1503 = vst.msk [vmem:[%s439 + $0x58] sm:$0xff] %vm1107, %v1487
        %1504 = vst.msk [vmem:[%s439 + $0x60] sm:$0xff] %vm1107, %v1488
        %1505 = vst.msk [vmem:[%s439 + $0x68] sm:$0xff] %vm1107, %v1489
        %1506 = vst.msk [vmem:[%s439 + $0x70] sm:$0xff] %vm1107, %v1490
        %1507 = vst.msk [vmem:[%s439 + $0x78] sm:$0xff] %vm1107, %v1491
        %v1509 = vsel %vm1107, %v1476, 0
        %1511 = vmatpush.msra.mxu0 0.0
        %1512 = vmatpush.msra.mxu0 0.0
        %1513 = vmatpush.msra.mxu0 0.0
        %1514 = vmatpush.msra.mxu0 0.0
        %1515 = vmatpush.msra.mxu0 0.0
        %1516 = vmatpush.msra.mxu0 0.0
        %1517 = vmatpush.msra.mxu0 0.0
        %1518 = vmatpush.msra.mxu0 0.0
        %1519 = vmatpush.msra.mxu0 0.0
        %1520 = vmatpush.msra.mxu0 0.0
        %1521 = vmatpush.msra.mxu0 0.0
        %1522 = vmatpush.msra.mxu0 0.0
        %1523 = vmatpush.msra.mxu0 0.0
        %1524 = vmatpush.msra.mxu0 0.0
        %1525 = vmatpush.msra.mxu0 0.0
        %1526 = vmatpush.msra.mxu0 %v441
        %1527 = vmatmul.f32.gmra.mxu0 %v1509
        %v1528 = vpop.f32.mrf.mxu0
        %v1529 = vadd.f32 0.0, %v1528
        %1530 = vdwg.mxu0
        %v1532 = vsel %vm1107, %v1477, 0
        %1534 = vmatpush.msra.mxu0 0.0
        %1535 = vmatpush.msra.mxu0 0.0
        %1536 = vmatpush.msra.mxu0 0.0
        %1537 = vmatpush.msra.mxu0 0.0
        %1538 = vmatpush.msra.mxu0 0.0
        %1539 = vmatpush.msra.mxu0 0.0
        %1540 = vmatpush.msra.mxu0 0.0
        %1541 = vmatpush.msra.mxu0 0.0
        %1542 = vmatpush.msra.mxu0 0.0
        %1543 = vmatpush.msra.mxu0 0.0
        %1544 = vmatpush.msra.mxu0 0.0
        %1545 = vmatpush.msra.mxu0 0.0
        %1546 = vmatpush.msra.mxu0 0.0
        %1547 = vmatpush.msra.mxu0 0.0
        %1548 = vmatpush.msra.mxu0 0.0
        %1549 = vmatpush.msra.mxu0 %v442
        %1550 = vmatmul.f32.gmra.mxu0 %v1532
        %v1551 = vpop.f32.mrf.mxu0
        %v1552 = vadd.f32 0.0, %v1551
        %1553 = vdwg.mxu0
        %v1555 = vsel %vm1107, %v1478, 0
        %1557 = vmatpush.msra.mxu0 0.0
        %1558 = vmatpush.msra.mxu0 0.0
        %1559 = vmatpush.msra.mxu0 0.0
        %1560 = vmatpush.msra.mxu0 0.0
        %1561 = vmatpush.msra.mxu0 0.0
        %1562 = vmatpush.msra.mxu0 0.0
        %1563 = vmatpush.msra.mxu0 0.0
        %1564 = vmatpush.msra.mxu0 0.0
        %1565 = vmatpush.msra.mxu0 0.0
        %1566 = vmatpush.msra.mxu0 0.0
        %1567 = vmatpush.msra.mxu0 0.0
        %1568 = vmatpush.msra.mxu0 0.0
        %1569 = vmatpush.msra.mxu0 0.0
        %1570 = vmatpush.msra.mxu0 0.0
        %1571 = vmatpush.msra.mxu0 0.0
        %1572 = vmatpush.msra.mxu0 %v443
        %1573 = vmatmul.f32.gmra.mxu0 %v1555
        %v1574 = vpop.f32.mrf.mxu0
        %v1575 = vadd.f32 0.0, %v1574
        %1576 = vdwg.mxu0
        %v1578 = vsel %vm1107, %v1479, 0
        %1580 = vmatpush.msra.mxu0 0.0
        %1581 = vmatpush.msra.mxu0 0.0
        %1582 = vmatpush.msra.mxu0 0.0
        %1583 = vmatpush.msra.mxu0 0.0
        %1584 = vmatpush.msra.mxu0 0.0
        %1585 = vmatpush.msra.mxu0 0.0
        %1586 = vmatpush.msra.mxu0 0.0
        %1587 = vmatpush.msra.mxu0 0.0
        %1588 = vmatpush.msra.mxu0 0.0
        %1589 = vmatpush.msra.mxu0 0.0
        %1590 = vmatpush.msra.mxu0 0.0
        %1591 = vmatpush.msra.mxu0 0.0
        %1592 = vmatpush.msra.mxu0 0.0
        %1593 = vmatpush.msra.mxu0 0.0
        %1594 = vmatpush.msra.mxu0 0.0
        %1595 = vmatpush.msra.mxu0 %v444
        %1596 = vmatmul.f32.gmra.mxu0 %v1578
        %v1597 = vpop.f32.mrf.mxu0
        %v1598 = vadd.f32 0.0, %v1597
        %1599 = vdwg.mxu0
        %v1601 = vsel %vm1107, %v1480, 0
        %1603 = vmatpush.msra.mxu0 0.0
        %1604 = vmatpush.msra.mxu0 0.0
        %1605 = vmatpush.msra.mxu0 0.0
        %1606 = vmatpush.msra.mxu0 0.0
        %1607 = vmatpush.msra.mxu0 0.0
        %1608 = vmatpush.msra.mxu0 0.0
        %1609 = vmatpush.msra.mxu0 0.0
        %1610 = vmatpush.msra.mxu0 0.0
        %1611 = vmatpush.msra.mxu0 0.0
        %1612 = vmatpush.msra.mxu0 0.0
        %1613 = vmatpush.msra.mxu0 0.0
        %1614 = vmatpush.msra.mxu0 0.0
        %1615 = vmatpush.msra.mxu0 0.0
        %1616 = vmatpush.msra.mxu0 0.0
        %1617 = vmatpush.msra.mxu0 0.0
        %1618 = vmatpush.msra.mxu0 %v445
        %1619 = vmatmul.f32.gmra.mxu0 %v1601
        %v1620 = vpop.f32.mrf.mxu0
        %v1621 = vadd.f32 0.0, %v1620
        %1622 = vdwg.mxu0
        %v1624 = vsel %vm1107, %v1481, 0
        %1626 = vmatpush.msra.mxu0 0.0
        %1627 = vmatpush.msra.mxu0 0.0
        %1628 = vmatpush.msra.mxu0 0.0
        %1629 = vmatpush.msra.mxu0 0.0
        %1630 = vmatpush.msra.mxu0 0.0
        %1631 = vmatpush.msra.mxu0 0.0
        %1632 = vmatpush.msra.mxu0 0.0
        %1633 = vmatpush.msra.mxu0 0.0
        %1634 = vmatpush.msra.mxu0 0.0
        %1635 = vmatpush.msra.mxu0 0.0
        %1636 = vmatpush.msra.mxu0 0.0
        %1637 = vmatpush.msra.mxu0 0.0
        %1638 = vmatpush.msra.mxu0 0.0
        %1639 = vmatpush.msra.mxu0 0.0
        %1640 = vmatpush.msra.mxu0 0.0
        %1641 = vmatpush.msra.mxu0 %v446
        %1642 = vmatmul.f32.gmra.mxu0 %v1624
        %v1643 = vpop.f32.mrf.mxu0
        %v1644 = vadd.f32 0.0, %v1643
        %1645 = vdwg.mxu0
        %v1647 = vsel %vm1107, %v1482, 0
        %1649 = vmatpush.msra.mxu0 0.0
        %1650 = vmatpush.msra.mxu0 0.0
        %1651 = vmatpush.msra.mxu0 0.0
        %1652 = vmatpush.msra.mxu0 0.0
        %1653 = vmatpush.msra.mxu0 0.0
        %1654 = vmatpush.msra.mxu0 0.0
        %1655 = vmatpush.msra.mxu0 0.0
        %1656 = vmatpush.msra.mxu0 0.0
        %1657 = vmatpush.msra.mxu0 0.0
        %1658 = vmatpush.msra.mxu0 0.0
        %1659 = vmatpush.msra.mxu0 0.0
        %1660 = vmatpush.msra.mxu0 0.0
        %1661 = vmatpush.msra.mxu0 0.0
        %1662 = vmatpush.msra.mxu0 0.0
        %1663 = vmatpush.msra.mxu0 0.0
        %1664 = vmatpush.msra.mxu0 %v447
        %1665 = vmatmul.f32.gmra.mxu0 %v1647
        %v1666 = vpop.f32.mrf.mxu0
        %v1667 = vadd.f32 0.0, %v1666
        %1668 = vdwg.mxu0
        %v1670 = vsel %vm1107, %v1483, 0
        %1672 = vmatpush.msra.mxu0 0.0
        %1673 = vmatpush.msra.mxu0 0.0
        %1674 = vmatpush.msra.mxu0 0.0
        %1675 = vmatpush.msra.mxu0 0.0
        %1676 = vmatpush.msra.mxu0 0.0
        %1677 = vmatpush.msra.mxu0 0.0
        %1678 = vmatpush.msra.mxu0 0.0
        %1679 = vmatpush.msra.mxu0 0.0
        %1680 = vmatpush.msra.mxu0 0.0
        %1681 = vmatpush.msra.mxu0 0.0
        %1682 = vmatpush.msra.mxu0 0.0
        %1683 = vmatpush.msra.mxu0 0.0
        %1684 = vmatpush.msra.mxu0 0.0
        %1685 = vmatpush.msra.mxu0 0.0
        %1686 = vmatpush.msra.mxu0 0.0
        %1687 = vmatpush.msra.mxu0 %v448
        %1688 = vmatmul.f32.gmra.mxu0 %v1670
        %v1689 = vpop.f32.mrf.mxu0
        %v1690 = vadd.f32 0.0, %v1689
        %1691 = vdwg.mxu0
        %v1693 = vsel %vm1107, %v1484, 0
        %1695 = vmatpush.msra.mxu0 0.0
        %1696 = vmatpush.msra.mxu0 0.0
        %1697 = vmatpush.msra.mxu0 0.0
        %1698 = vmatpush.msra.mxu0 0.0
        %1699 = vmatpush.msra.mxu0 0.0
        %1700 = vmatpush.msra.mxu0 0.0
        %1701 = vmatpush.msra.mxu0 0.0
        %1702 = vmatpush.msra.mxu0 0.0
        %1703 = vmatpush.msra.mxu0 0.0
        %1704 = vmatpush.msra.mxu0 0.0
        %1705 = vmatpush.msra.mxu0 0.0
        %1706 = vmatpush.msra.mxu0 0.0
        %1707 = vmatpush.msra.mxu0 0.0
        %1708 = vmatpush.msra.mxu0 0.0
        %1709 = vmatpush.msra.mxu0 0.0
        %1710 = vmatpush.msra.mxu0 %v449
        %1711 = vmatmul.f32.gmra.mxu0 %v1693
        %v1712 = vpop.f32.mrf.mxu0
        %v1713 = vadd.f32 0.0, %v1712
        %1714 = vdwg.mxu0
        %v1716 = vsel %vm1107, %v1485, 0
        %1718 = vmatpush.msra.mxu0 0.0
        %1719 = vmatpush.msra.mxu0 0.0
        %1720 = vmatpush.msra.mxu0 0.0
        %1721 = vmatpush.msra.mxu0 0.0
        %1722 = vmatpush.msra.mxu0 0.0
        %1723 = vmatpush.msra.mxu0 0.0
        %1724 = vmatpush.msra.mxu0 0.0
        %1725 = vmatpush.msra.mxu0 0.0
        %1726 = vmatpush.msra.mxu0 0.0
        %1727 = vmatpush.msra.mxu0 0.0
        %1728 = vmatpush.msra.mxu0 0.0
        %1729 = vmatpush.msra.mxu0 0.0
        %1730 = vmatpush.msra.mxu0 0.0
        %1731 = vmatpush.msra.mxu0 0.0
        %1732 = vmatpush.msra.mxu0 0.0
        %1733 = vmatpush.msra.mxu0 %v450
        %1734 = vmatmul.f32.gmra.mxu0 %v1716
        %v1735 = vpop.f32.mrf.mxu0
        %v1736 = vadd.f32 0.0, %v1735
        %1737 = vdwg.mxu0
        %v1739 = vsel %vm1107, %v1486, 0
        %1741 = vmatpush.msra.mxu0 0.0
        %1742 = vmatpush.msra.mxu0 0.0
        %1743 = vmatpush.msra.mxu0 0.0
        %1744 = vmatpush.msra.mxu0 0.0
        %1745 = vmatpush.msra.mxu0 0.0
        %1746 = vmatpush.msra.mxu0 0.0
        %1747 = vmatpush.msra.mxu0 0.0
        %1748 = vmatpush.msra.mxu0 0.0
        %1749 = vmatpush.msra.mxu0 0.0
        %1750 = vmatpush.msra.mxu0 0.0
        %1751 = vmatpush.msra.mxu0 0.0
        %1752 = vmatpush.msra.mxu0 0.0
        %1753 = vmatpush.msra.mxu0 0.0
        %1754 = vmatpush.msra.mxu0 0.0
        %1755 = vmatpush.msra.mxu0 0.0
        %1756 = vmatpush.msra.mxu0 %v451
        %1757 = vmatmul.f32.gmra.mxu0 %v1739
        %v1758 = vpop.f32.mrf.mxu0
        %v1759 = vadd.f32 0.0, %v1758
        %1760 = vdwg.mxu0
        %v1762 = vsel %vm1107, %v1487, 0
        %1764 = vmatpush.msra.mxu0 0.0
        %1765 = vmatpush.msra.mxu0 0.0
        %1766 = vmatpush.msra.mxu0 0.0
        %1767 = vmatpush.msra.mxu0 0.0
        %1768 = vmatpush.msra.mxu0 0.0
        %1769 = vmatpush.msra.mxu0 0.0
        %1770 = vmatpush.msra.mxu0 0.0
        %1771 = vmatpush.msra.mxu0 0.0
        %1772 = vmatpush.msra.mxu0 0.0
        %1773 = vmatpush.msra.mxu0 0.0
        %1774 = vmatpush.msra.mxu0 0.0
        %1775 = vmatpush.msra.mxu0 0.0
        %1776 = vmatpush.msra.mxu0 0.0
        %1777 = vmatpush.msra.mxu0 0.0
        %1778 = vmatpush.msra.mxu0 0.0
        %1779 = vmatpush.msra.mxu0 %v452
        %1780 = vmatmul.f32.gmra.mxu0 %v1762
        %v1781 = vpop.f32.mrf.mxu0
        %v1782 = vadd.f32 0.0, %v1781
        %1783 = vdwg.mxu0
        %v1785 = vsel %vm1107, %v1488, 0
        %1787 = vmatpush.msra.mxu0 0.0
        %1788 = vmatpush.msra.mxu0 0.0
        %1789 = vmatpush.msra.mxu0 0.0
        %1790 = vmatpush.msra.mxu0 0.0
        %1791 = vmatpush.msra.mxu0 0.0
        %1792 = vmatpush.msra.mxu0 0.0
        %1793 = vmatpush.msra.mxu0 0.0
        %1794 = vmatpush.msra.mxu0 0.0
        %1795 = vmatpush.msra.mxu0 0.0
        %1796 = vmatpush.msra.mxu0 0.0
        %1797 = vmatpush.msra.mxu0 0.0
        %1798 = vmatpush.msra.mxu0 0.0
        %1799 = vmatpush.msra.mxu0 0.0
        %1800 = vmatpush.msra.mxu0 0.0
        %1801 = vmatpush.msra.mxu0 0.0
        %1802 = vmatpush.msra.mxu0 %v453
        %1803 = vmatmul.f32.gmra.mxu0 %v1785
        %v1804 = vpop.f32.mrf.mxu0
        %v1805 = vadd.f32 0.0, %v1804
        %1806 = vdwg.mxu0
        %v1808 = vsel %vm1107, %v1489, 0
        %1810 = vmatpush.msra.mxu0 0.0
        %1811 = vmatpush.msra.mxu0 0.0
        %1812 = vmatpush.msra.mxu0 0.0
        %1813 = vmatpush.msra.mxu0 0.0
        %1814 = vmatpush.msra.mxu0 0.0
        %1815 = vmatpush.msra.mxu0 0.0
        %1816 = vmatpush.msra.mxu0 0.0
        %1817 = vmatpush.msra.mxu0 0.0
        %1818 = vmatpush.msra.mxu0 0.0
        %1819 = vmatpush.msra.mxu0 0.0
        %1820 = vmatpush.msra.mxu0 0.0
        %1821 = vmatpush.msra.mxu0 0.0
        %1822 = vmatpush.msra.mxu0 0.0
        %1823 = vmatpush.msra.mxu0 0.0
        %1824 = vmatpush.msra.mxu0 0.0
        %1825 = vmatpush.msra.mxu0 %v454
        %1826 = vmatmul.f32.gmra.mxu0 %v1808
        %v1827 = vpop.f32.mrf.mxu0
        %v1828 = vadd.f32 0.0, %v1827
        %1829 = vdwg.mxu0
        %v1831 = vsel %vm1107, %v1490, 0
        %1833 = vmatpush.msra.mxu0 0.0
        %1834 = vmatpush.msra.mxu0 0.0
        %1835 = vmatpush.msra.mxu0 0.0
        %1836 = vmatpush.msra.mxu0 0.0
        %1837 = vmatpush.msra.mxu0 0.0
        %1838 = vmatpush.msra.mxu0 0.0
        %1839 = vmatpush.msra.mxu0 0.0
        %1840 = vmatpush.msra.mxu0 0.0
        %1841 = vmatpush.msra.mxu0 0.0
        %1842 = vmatpush.msra.mxu0 0.0
        %1843 = vmatpush.msra.mxu0 0.0
        %1844 = vmatpush.msra.mxu0 0.0
        %1845 = vmatpush.msra.mxu0 0.0
        %1846 = vmatpush.msra.mxu0 0.0
        %1847 = vmatpush.msra.mxu0 0.0
        %1848 = vmatpush.msra.mxu0 %v455
        %1849 = vmatmul.f32.gmra.mxu0 %v1831
        %v1850 = vpop.f32.mrf.mxu0
        %v1851 = vadd.f32 0.0, %v1850
        %1852 = vdwg.mxu0
        %v1854 = vsel %vm1107, %v1491, 0
        %1856 = vmatpush.msra.mxu0 0.0
        %1857 = vmatpush.msra.mxu0 0.0
        %1858 = vmatpush.msra.mxu0 0.0
        %1859 = vmatpush.msra.mxu0 0.0
        %1860 = vmatpush.msra.mxu0 0.0
        %1861 = vmatpush.msra.mxu0 0.0
        %1862 = vmatpush.msra.mxu0 0.0
        %1863 = vmatpush.msra.mxu0 0.0
        %1864 = vmatpush.msra.mxu0 0.0
        %1865 = vmatpush.msra.mxu0 0.0
        %1866 = vmatpush.msra.mxu0 0.0
        %1867 = vmatpush.msra.mxu0 0.0
        %1868 = vmatpush.msra.mxu0 0.0
        %1869 = vmatpush.msra.mxu0 0.0
        %1870 = vmatpush.msra.mxu0 0.0
        %1871 = vmatpush.msra.mxu0 %v456
        %1872 = vmatmul.f32.gmra.mxu0 %v1854
        %v1873 = vpop.f32.mrf.mxu0
        %v1874 = vadd.f32 0.0, %v1873
        %1875 = vdwg.mxu0
        %1876 = vrot.lane.b32.xlu0 %v441, 32
        %v1877 = vpop.permute.xlu0 %1876
        %1878 = vrot.lane.b32.xlu0 %v442, 32
        %v1879 = vpop.permute.xlu0 %1878
        %1880 = vrot.lane.b32.xlu0 %v443, 32
        %v1881 = vpop.permute.xlu0 %1880
        %1882 = vrot.lane.b32.xlu0 %v444, 32
        %v1883 = vpop.permute.xlu0 %1882
        %1884 = vrot.lane.b32.xlu0 %v445, 32
        %v1885 = vpop.permute.xlu0 %1884
        %1886 = vrot.lane.b32.xlu0 %v446, 32
        %v1887 = vpop.permute.xlu0 %1886
        %1888 = vrot.lane.b32.xlu0 %v447, 32
        %v1889 = vpop.permute.xlu0 %1888
        %1890 = vrot.lane.b32.xlu0 %v448, 32
        %v1891 = vpop.permute.xlu0 %1890
        %1892 = vrot.lane.b32.xlu0 %v449, 32
        %v1893 = vpop.permute.xlu0 %1892
        %1894 = vrot.lane.b32.xlu0 %v450, 32
        %v1895 = vpop.permute.xlu0 %1894
        %1896 = vrot.lane.b32.xlu0 %v451, 32
        %v1897 = vpop.permute.xlu0 %1896
        %1898 = vrot.lane.b32.xlu0 %v452, 32
        %v1899 = vpop.permute.xlu0 %1898
        %1900 = vrot.lane.b32.xlu0 %v453, 32
        %v1901 = vpop.permute.xlu0 %1900
        %1902 = vrot.lane.b32.xlu0 %v454, 32
        %v1903 = vpop.permute.xlu0 %1902
        %1904 = vrot.lane.b32.xlu0 %v455, 32
        %v1905 = vpop.permute.xlu0 %1904
        %1906 = vrot.lane.b32.xlu0 %v456, 32
        %v1907 = vpop.permute.xlu0 %1906
        %v1924 = vsel %vm495, %v1529, %v1877
        %v1925 = vsel %vm495, %v1552, %v1879
        %v1926 = vsel %vm495, %v1575, %v1881
        %v1927 = vsel %vm495, %v1598, %v1883
        %v1928 = vsel %vm495, %v1621, %v1885
        %v1929 = vsel %vm495, %v1644, %v1887
        %v1930 = vsel %vm495, %v1667, %v1889
        %v1931 = vsel %vm495, %v1690, %v1891
        %v1932 = vsel %vm495, %v1713, %v1893
        %v1933 = vsel %vm495, %v1736, %v1895
        %v1934 = vsel %vm495, %v1759, %v1897
        %v1935 = vsel %vm495, %v1782, %v1899
        %v1936 = vsel %vm495, %v1805, %v1901
        %v1937 = vsel %vm495, %v1828, %v1903
        %v1938 = vsel %vm495, %v1851, %v1905
        %v1939 = vsel %vm495, %v1874, %v1907
        %v1940 = vld [vmem:[%s5] sm:$0xff]
        %v1941 = vld [vmem:[%s5 + $0x8] sm:$0xff]
        %v1942 = vld [vmem:[%s5 + $0x10] sm:$0xff]
        %v1943 = vld [vmem:[%s5 + $0x18] sm:$0xff]
        %v1944 = vld [vmem:[%s5 + $0x20] sm:$0xff]
        %v1945 = vld [vmem:[%s5 + $0x28] sm:$0xff]
        %v1946 = vld [vmem:[%s5 + $0x30] sm:$0xff]
        %v1947 = vld [vmem:[%s5 + $0x38] sm:$0xff]
        %v1948 = vld [vmem:[%s6] sm:$0x1]
        %v1950 = vperm.slane %v1948, 0
        %vm1952 = vcmask 523264
        %v1954 = vsel %vm1952, %v1924, 0
        %v1957 = vsel %vm1952, %v1925, 0
        %v1960 = vsel %vm1952, %v1926, 0
        %v1963 = vsel %vm1952, %v1927, 0
        %v1966 = vsel %vm1952, %v1928, 0
        %v1969 = vsel %vm1952, %v1929, 0
        %v1972 = vsel %vm1952, %v1930, 0
        %v1975 = vsel %vm1952, %v1931, 0
        %v1978 = vsel %vm1952, %v1932, 0
        %v1981 = vsel %vm1952, %v1933, 0
        %v1984 = vsel %vm1952, %v1934, 0
        %v1987 = vsel %vm1952, %v1935, 0
        %v1990 = vsel %vm1952, %v1936, 0
        %v1993 = vsel %vm1952, %v1937, 0
        %v1996 = vsel %vm1952, %v1938, 0
        %v1999 = vsel %vm1952, %v1939, 0
        %2001 = vmatpush.msra.mxu0 0.0
        %2002 = vmatpush.msra.mxu0 0.0
        %2003 = vmatpush.msra.mxu0 0.0
        %2004 = vmatpush.msra.mxu0 0.0
        %2005 = vmatpush.msra.mxu0 0.0
        %2006 = vmatpush.msra.mxu0 0.0
        %2007 = vmatpush.msra.mxu0 0.0
        %2008 = vmatpush.msra.mxu0 0.0
        %2009 = vmatpush.msra.mxu0 %v1947
        %2010 = vmatpush.msra.mxu0 %v1946
        %2011 = vmatpush.msra.mxu0 %v1945
        %2012 = vmatpush.msra.mxu0 %v1944
        %2013 = vmatpush.msra.mxu0 %v1943
        %2014 = vmatpush.msra.mxu0 %v1942
        %2015 = vmatpush.msra.mxu0 %v1941
        %2016 = vmatpush.msra.mxu0 %v1940
        %2017 = vmatmul.f32.gmra.mxu0 %v1954
        %v2018 = vpop.f32.mrf.mxu0
        %v2019 = vadd.f32 %v1950, %v2018
        %2020 = vmatmul.f32.gmra.mxu0 %v1957
        %v2021 = vpop.f32.mrf.mxu0
        %v2022 = vadd.f32 %v1950, %v2021
        %2023 = vmatmul.f32.gmra.mxu0 %v1960
        %v2024 = vpop.f32.mrf.mxu0
        %v2025 = vadd.f32 %v1950, %v2024
        %2026 = vmatmul.f32.gmra.mxu0 %v1963
        %v2027 = vpop.f32.mrf.mxu0
        %v2028 = vadd.f32 %v1950, %v2027
        %2029 = vmatmul.f32.gmra.mxu0 %v1966
        %v2030 = vpop.f32.mrf.mxu0
        %v2031 = vadd.f32 %v1950, %v2030
        %2032 = vmatmul.f32.gmra.mxu0 %v1969
        %v2033 = vpop.f32.mrf.mxu0
        %v2034 = vadd.f32 %v1950, %v2033
        %2035 = vmatmul.f32.gmra.mxu0 %v1972
        %v2036 = vpop.f32.mrf.mxu0
        %v2037 = vadd.f32 %v1950, %v2036
        %2038 = vmatmul.f32.gmra.mxu0 %v1975
        %v2039 = vpop.f32.mrf.mxu0
        %v2040 = vadd.f32 %v1950, %v2039
        %2041 = vmatmul.f32.gmra.mxu0 %v1978
        %v2042 = vpop.f32.mrf.mxu0
        %v2043 = vadd.f32 %v1950, %v2042
        %2044 = vmatmul.f32.gmra.mxu0 %v1981
        %v2045 = vpop.f32.mrf.mxu0
        %v2046 = vadd.f32 %v1950, %v2045
        %2047 = vmatmul.f32.gmra.mxu0 %v1984
        %v2048 = vpop.f32.mrf.mxu0
        %v2049 = vadd.f32 %v1950, %v2048
        %2050 = vmatmul.f32.gmra.mxu0 %v1987
        %v2051 = vpop.f32.mrf.mxu0
        %v2052 = vadd.f32 %v1950, %v2051
        %2053 = vmatmul.f32.gmra.mxu0 %v1990
        %v2054 = vpop.f32.mrf.mxu0
        %v2055 = vadd.f32 %v1950, %v2054
        %2056 = vmatmul.f32.gmra.mxu0 %v1993
        %v2057 = vpop.f32.mrf.mxu0
        %v2058 = vadd.f32 %v1950, %v2057
        %2059 = vmatmul.f32.gmra.mxu0 %v1996
        %v2060 = vpop.f32.mrf.mxu0
        %v2061 = vadd.f32 %v1950, %v2060
        %2062 = vmatmul.f32.gmra.mxu0 %v1999
        %v2063 = vpop.f32.mrf.mxu0
        %v2064 = vadd.f32 %v1950, %v2063
        %2065 = vdwg.mxu0
        %v2066 = vmax.f32 %v2019, 0.0
        %v2067 = vmax.f32 %v2022, 0.0
        %v2068 = vmax.f32 %v2025, 0.0
        %v2069 = vmax.f32 %v2028, 0.0
        %v2070 = vmax.f32 %v2031, 0.0
        %v2071 = vmax.f32 %v2034, 0.0
        %v2072 = vmax.f32 %v2037, 0.0
        %v2073 = vmax.f32 %v2040, 0.0
        %v2074 = vmax.f32 %v2043, 0.0
        %v2075 = vmax.f32 %v2046, 0.0
        %v2076 = vmax.f32 %v2049, 0.0
        %v2077 = vmax.f32 %v2052, 0.0
        %v2078 = vmax.f32 %v2055, 0.0
        %v2079 = vmax.f32 %v2058, 0.0
        %v2080 = vmax.f32 %v2061, 0.0
        %v2081 = vmax.f32 %v2064, 0.0
        %v2082 = vlaneseq
        %v2083 = vshrl.u32 %v2082, 7
        %vm2084 = vcmp.lt.s32.totalorder %v2083, %v979
        %vm2085 = vcmp.lt.s32.totalorder %v2083, %v980
        %vm2086 = vcmp.lt.s32.totalorder %v2083, %v981
        %vm2087 = vcmp.lt.s32.totalorder %v2083, %v982
        %vm2088 = vcmp.lt.s32.totalorder %v2083, %v983
        %vm2089 = vcmp.lt.s32.totalorder %v2083, %v984
        %vm2090 = vcmp.lt.s32.totalorder %v2083, %v985
        %vm2091 = vcmp.lt.s32.totalorder %v2083, %v986
        %vm2092 = vcmp.lt.s32.totalorder %v2083, %v987
        %vm2093 = vcmp.lt.s32.totalorder %v2083, %v988
        %vm2094 = vcmp.lt.s32.totalorder %v2083, %v989
        %vm2095 = vcmp.lt.s32.totalorder %v2083, %v990
        %vm2096 = vcmp.lt.s32.totalorder %v2083, %v991
        %vm2097 = vcmp.lt.s32.totalorder %v2083, %v992
        %vm2098 = vcmp.lt.s32.totalorder %v2083, %v993
        %vm2099 = vcmp.lt.s32.totalorder %v2083, %v994
        %v2100 = vsel %vm2084, 1, 0
        %v2101 = vsel %vm2085, 1, 0
        %v2102 = vsel %vm2086, 1, 0
        %v2103 = vsel %vm2087, 1, 0
        %v2104 = vsel %vm2088, 1, 0
        %v2105 = vsel %vm2089, 1, 0
        %v2106 = vsel %vm2090, 1, 0
        %v2107 = vsel %vm2091, 1, 0
        %v2108 = vsel %vm2092, 1, 0
        %v2109 = vsel %vm2093, 1, 0
        %v2110 = vsel %vm2094, 1, 0
        %v2111 = vsel %vm2095, 1, 0
        %v2112 = vsel %vm2096, 1, 0
        %v2113 = vsel %vm2097, 1, 0
        %v2114 = vsel %vm2098, 1, 0
        %v2115 = vsel %vm2099, 1, 0
        %v2116 = vcvt.s32.f32 %v2100
        %v2117 = vcvt.s32.f32 %v2101
        %v2118 = vcvt.s32.f32 %v2102
        %v2119 = vcvt.s32.f32 %v2103
        %v2120 = vcvt.s32.f32 %v2104
        %v2121 = vcvt.s32.f32 %v2105
        %v2122 = vcvt.s32.f32 %v2106
        %v2123 = vcvt.s32.f32 %v2107
        %v2124 = vcvt.s32.f32 %v2108
        %v2125 = vcvt.s32.f32 %v2109
        %v2126 = vcvt.s32.f32 %v2110
        %v2127 = vcvt.s32.f32 %v2111
        %v2128 = vcvt.s32.f32 %v2112
        %v2129 = vcvt.s32.f32 %v2113
        %v2130 = vcvt.s32.f32 %v2114
        %v2131 = vcvt.s32.f32 %v2115
        %2133 = vset.pattern.permute.xlu0 0
        %2134 = vperm.xlu0 %2133, %v2116
        %v2135 = vpop.permute.xlu0 %2134
        %2138 = vset.pattern.permute.xlu0 0
        %2139 = vperm.xlu0 %2138, %v2117
        %v2140 = vpop.permute.xlu0 %2139
        %2143 = vset.pattern.permute.xlu0 0
        %2144 = vperm.xlu0 %2143, %v2118
        %v2145 = vpop.permute.xlu0 %2144
        %2148 = vset.pattern.permute.xlu0 0
        %2149 = vperm.xlu0 %2148, %v2119
        %v2150 = vpop.permute.xlu0 %2149
        %2153 = vset.pattern.permute.xlu0 0
        %2154 = vperm.xlu0 %2153, %v2120
        %v2155 = vpop.permute.xlu0 %2154
        %2158 = vset.pattern.permute.xlu0 0
        %2159 = vperm.xlu0 %2158, %v2121
        %v2160 = vpop.permute.xlu0 %2159
        %2163 = vset.pattern.permute.xlu0 0
        %2164 = vperm.xlu0 %2163, %v2122
        %v2165 = vpop.permute.xlu0 %2164
        %2168 = vset.pattern.permute.xlu0 0
        %2169 = vperm.xlu0 %2168, %v2123
        %v2170 = vpop.permute.xlu0 %2169
        %2173 = vset.pattern.permute.xlu0 0
        %2174 = vperm.xlu0 %2173, %v2124
        %v2175 = vpop.permute.xlu0 %2174
        %2178 = vset.pattern.permute.xlu0 0
        %2179 = vperm.xlu0 %2178, %v2125
        %v2180 = vpop.permute.xlu0 %2179
        %2183 = vset.pattern.permute.xlu0 0
        %2184 = vperm.xlu0 %2183, %v2126
        %v2185 = vpop.permute.xlu0 %2184
        %2188 = vset.pattern.permute.xlu0 0
        %2189 = vperm.xlu0 %2188, %v2127
        %v2190 = vpop.permute.xlu0 %2189
        %2193 = vset.pattern.permute.xlu0 0
        %2194 = vperm.xlu0 %2193, %v2128
        %v2195 = vpop.permute.xlu0 %2194
        %2198 = vset.pattern.permute.xlu0 0
        %2199 = vperm.xlu0 %2198, %v2129
        %v2200 = vpop.permute.xlu0 %2199
        %2203 = vset.pattern.permute.xlu0 0
        %2204 = vperm.xlu0 %2203, %v2130
        %v2205 = vpop.permute.xlu0 %2204
        %2208 = vset.pattern.permute.xlu0 0
        %2209 = vperm.xlu0 %2208, %v2131
        %v2210 = vpop.permute.xlu0 %2209
        %v2212 = vmul.f32 %v2066, %v2135
        %v2213 = vmul.f32 %v2067, %v2140
        %v2214 = vmul.f32 %v2068, %v2145
        %v2215 = vmul.f32 %v2069, %v2150
        %v2216 = vmul.f32 %v2070, %v2155
        %v2217 = vmul.f32 %v2071, %v2160
        %v2218 = vmul.f32 %v2072, %v2165
        %v2219 = vmul.f32 %v2073, %v2170
        %v2220 = vmul.f32 %v2074, %v2175
        %v2221 = vmul.f32 %v2075, %v2180
        %v2222 = vmul.f32 %v2076, %v2185
        %v2223 = vmul.f32 %v2077, %v2190
        %v2224 = vmul.f32 %v2078, %v2195
        %v2225 = vmul.f32 %v2079, %v2200
        %v2226 = vmul.f32 %v2080, %v2205
        %v2227 = vmul.f32 %v2081, %v2210
        %v2228 = vsel %vm495, %v2212, 0.0
        %v2229 = vrot.slane %v2228, 4
        %v2230 = vadd.f32 %v2228, %v2229
        %v2231 = vrot.slane %v2230, 2
        %v2232 = vadd.f32 %v2230, %v2231
        %v2233 = vrot.slane %v2232, 1
        %v2234 = vadd.f32 %v2232, %v2233
        %v2235 = vsel %vm495, %v2213, 0.0
        %v2236 = vrot.slane %v2235, 4
        %v2237 = vadd.f32 %v2235, %v2236
        %v2238 = vrot.slane %v2237, 2
        %v2239 = vadd.f32 %v2237, %v2238
        %v2240 = vrot.slane %v2239, 1
        %v2241 = vadd.f32 %v2239, %v2240
        %v2242 = vsel %vm495, %v2214, 0.0
        %v2243 = vrot.slane %v2242, 4
        %v2244 = vadd.f32 %v2242, %v2243
        %v2245 = vrot.slane %v2244, 2
        %v2246 = vadd.f32 %v2244, %v2245
        %v2247 = vrot.slane %v2246, 1
        %v2248 = vadd.f32 %v2246, %v2247
        %v2249 = vsel %vm495, %v2215, 0.0
        %v2250 = vrot.slane %v2249, 4
        %v2251 = vadd.f32 %v2249, %v2250
        %v2252 = vrot.slane %v2251, 2
        %v2253 = vadd.f32 %v2251, %v2252
        %v2254 = vrot.slane %v2253, 1
        %v2255 = vadd.f32 %v2253, %v2254
        %v2256 = vsel %vm495, %v2216, 0.0
        %v2257 = vrot.slane %v2256, 4
        %v2258 = vadd.f32 %v2256, %v2257
        %v2259 = vrot.slane %v2258, 2
        %v2260 = vadd.f32 %v2258, %v2259
        %v2261 = vrot.slane %v2260, 1
        %v2262 = vadd.f32 %v2260, %v2261
        %v2263 = vsel %vm495, %v2217, 0.0
        %v2264 = vrot.slane %v2263, 4
        %v2265 = vadd.f32 %v2263, %v2264
        %v2266 = vrot.slane %v2265, 2
        %v2267 = vadd.f32 %v2265, %v2266
        %v2268 = vrot.slane %v2267, 1
        %v2269 = vadd.f32 %v2267, %v2268
        %v2270 = vsel %vm495, %v2218, 0.0
        %v2271 = vrot.slane %v2270, 4
        %v2272 = vadd.f32 %v2270, %v2271
        %v2273 = vrot.slane %v2272, 2
        %v2274 = vadd.f32 %v2272, %v2273
        %v2275 = vrot.slane %v2274, 1
        %v2276 = vadd.f32 %v2274, %v2275
        %v2277 = vsel %vm495, %v2219, 0.0
        %v2278 = vrot.slane %v2277, 4
        %v2279 = vadd.f32 %v2277, %v2278
        %v2280 = vrot.slane %v2279, 2
        %v2281 = vadd.f32 %v2279, %v2280
        %v2282 = vrot.slane %v2281, 1
        %v2283 = vadd.f32 %v2281, %v2282
        %v2284 = vsel %vm495, %v2220, 0.0
        %v2285 = vrot.slane %v2284, 4
        %v2286 = vadd.f32 %v2284, %v2285
        %v2287 = vrot.slane %v2286, 2
        %v2288 = vadd.f32 %v2286, %v2287
        %v2289 = vrot.slane %v2288, 1
        %v2290 = vadd.f32 %v2288, %v2289
        %v2291 = vsel %vm495, %v2221, 0.0
        %v2292 = vrot.slane %v2291, 4
        %v2293 = vadd.f32 %v2291, %v2292
        %v2294 = vrot.slane %v2293, 2
        %v2295 = vadd.f32 %v2293, %v2294
        %v2296 = vrot.slane %v2295, 1
        %v2297 = vadd.f32 %v2295, %v2296
        %v2298 = vsel %vm495, %v2222, 0.0
        %v2299 = vrot.slane %v2298, 4
        %v2300 = vadd.f32 %v2298, %v2299
        %v2301 = vrot.slane %v2300, 2
        %v2302 = vadd.f32 %v2300, %v2301
        %v2303 = vrot.slane %v2302, 1
        %v2304 = vadd.f32 %v2302, %v2303
        %v2305 = vsel %vm495, %v2223, 0.0
        %v2306 = vrot.slane %v2305, 4
        %v2307 = vadd.f32 %v2305, %v2306
        %v2308 = vrot.slane %v2307, 2
        %v2309 = vadd.f32 %v2307, %v2308
        %v2310 = vrot.slane %v2309, 1
        %v2311 = vadd.f32 %v2309, %v2310
        %v2312 = vsel %vm495, %v2224, 0.0
        %v2313 = vrot.slane %v2312, 4
        %v2314 = vadd.f32 %v2312, %v2313
        %v2315 = vrot.slane %v2314, 2
        %v2316 = vadd.f32 %v2314, %v2315
        %v2317 = vrot.slane %v2316, 1
        %v2318 = vadd.f32 %v2316, %v2317
        %v2319 = vsel %vm495, %v2225, 0.0
        %v2320 = vrot.slane %v2319, 4
        %v2321 = vadd.f32 %v2319, %v2320
        %v2322 = vrot.slane %v2321, 2
        %v2323 = vadd.f32 %v2321, %v2322
        %v2324 = vrot.slane %v2323, 1
        %v2325 = vadd.f32 %v2323, %v2324
        %v2326 = vsel %vm495, %v2226, 0.0
        %v2327 = vrot.slane %v2326, 4
        %v2328 = vadd.f32 %v2326, %v2327
        %v2329 = vrot.slane %v2328, 2
        %v2330 = vadd.f32 %v2328, %v2329
        %v2331 = vrot.slane %v2330, 1
        %v2332 = vadd.f32 %v2330, %v2331
        %v2333 = vsel %vm495, %v2227, 0.0
        %v2334 = vrot.slane %v2333, 4
        %v2335 = vadd.f32 %v2333, %v2334
        %v2336 = vrot.slane %v2335, 2
        %v2337 = vadd.f32 %v2335, %v2336
        %v2338 = vrot.slane %v2337, 1
        %v2339 = vadd.f32 %v2337, %v2338
        %2341 = vset.pattern.permute.xlu0 0
        %2342 = vperm.xlu0 %2341, %v475
        %v2343 = vpop.permute.xlu0 %2342
        %2345 = vset.pattern.permute.xlu0 0
        %2346 = vperm.xlu0 %2345, %v476
        %v2347 = vpop.permute.xlu0 %2346
        %v2348 = vrot.slane %v2343, 1
        %v2349 = vrot.slane %v2343, 2
        %v2350 = vrot.slane %v2343, 3
        %v2351 = vrot.slane %v2343, 4
        %v2352 = vrot.slane %v2343, 5
        %v2353 = vrot.slane %v2343, 6
        %v2354 = vrot.slane %v2343, 7
        %v2355 = vrot.slane %v2347, 1
        %v2356 = vrot.slane %v2347, 2
        %v2357 = vrot.slane %v2347, 3
        %v2358 = vrot.slane %v2347, 4
        %v2359 = vrot.slane %v2347, 5
        %v2360 = vrot.slane %v2347, 6
        %v2361 = vrot.slane %v2347, 7
        %v2378 = vmul.f32 %v2234, %v2343
        %v2379 = vmul.f32 %v2241, %v2348
        %v2380 = vmul.f32 %v2248, %v2349
        %v2381 = vmul.f32 %v2255, %v2350
        %v2382 = vmul.f32 %v2262, %v2351
        %v2383 = vmul.f32 %v2269, %v2352
        %v2384 = vmul.f32 %v2276, %v2353
        %v2385 = vmul.f32 %v2283, %v2354
        %v2386 = vmul.f32 %v2290, %v2347
        %v2387 = vmul.f32 %v2297, %v2355
        %v2388 = vmul.f32 %v2304, %v2356
        %v2389 = vmul.f32 %v2311, %v2357
        %v2390 = vmul.f32 %v2318, %v2358
        %v2391 = vmul.f32 %v2325, %v2359
        %v2392 = vmul.f32 %v2332, %v2360
        %v2393 = vmul.f32 %v2339, %v2361
        %v2394 = vld [vmem:[%s7] sm:$0xff]
        %v2395 = vld [vmem:[%s7 + $0x8] sm:$0xff]
        %v2396 = vld [vmem:[%s7 + $0x10] sm:$0xff]
        %v2397 = vld [vmem:[%s7 + $0x18] sm:$0xff]
        %v2398 = vld [vmem:[%s8] sm:$0x1]
        %v2400 = vperm.slane %v2398, 0
        %v2418 = vrot.slane %v2379, 7
        %vm2419 = vcmask 1041409
        %v2420 = vsel %vm2419, %v2418, %v2378
        %v2421 = vrot.slane %v2380, 6
        %vm2422 = vcmask 1042434
        %v2423 = vsel %vm2422, %v2421, %v2420
        %v2424 = vrot.slane %v2381, 5
        %vm2425 = vcmask 1043459
        %v2426 = vsel %vm2425, %v2424, %v2423
        %v2427 = vrot.slane %v2382, 4
        %vm2428 = vcmask 1044484
        %v2429 = vsel %vm2428, %v2427, %v2426
        %v2430 = vrot.slane %v2383, 3
        %vm2431 = vcmask 1045509
        %v2432 = vsel %vm2431, %v2430, %v2429
        %v2433 = vrot.slane %v2384, 2
        %vm2434 = vcmask 1046534
        %v2435 = vsel %vm2434, %v2433, %v2432
        %v2436 = vrot.slane %v2385, 1
        %vm2437 = vcmask 1047559
        %v2438 = vsel %vm2437, %v2436, %v2435
        %v2439 = vrot.slane %v2387, 7
        %v2440 = vsel %vm2419, %v2439, %v2386
        %v2441 = vrot.slane %v2388, 6
        %v2442 = vsel %vm2422, %v2441, %v2440
        %v2443 = vrot.slane %v2389, 5
        %v2444 = vsel %vm2425, %v2443, %v2442
        %v2445 = vrot.slane %v2390, 4
        %v2446 = vsel %vm2428, %v2445, %v2444
        %v2447 = vrot.slane %v2391, 3
        %v2448 = vsel %vm2431, %v2447, %v2446
        %v2449 = vrot.slane %v2392, 2
        %v2450 = vsel %vm2434, %v2449, %v2448
        %v2451 = vrot.slane %v2393, 1
        %v2452 = vsel %vm2437, %v2451, %v2450
        %v2453 = vsel %vm495, %v2438, 0
        %v2455 = vsel %vm495, %v2452, 0
        %2457 = vmatpush.msra.mxu0 0.0
        %2458 = vmatpush.msra.mxu0 0.0
        %2459 = vmatpush.msra.mxu0 0.0
        %2460 = vmatpush.msra.mxu0 0.0
        %2461 = vmatpush.msra.mxu0 0.0
        %2462 = vmatpush.msra.mxu0 0.0
        %2463 = vmatpush.msra.mxu0 0.0
        %2464 = vmatpush.msra.mxu0 0.0
        %2465 = vmatpush.msra.mxu0 0.0
        %2466 = vmatpush.msra.mxu0 0.0
        %2467 = vmatpush.msra.mxu0 0.0
        %2468 = vmatpush.msra.mxu0 0.0
        %2469 = vmatpush.msra.mxu0 %v2397
        %2470 = vmatpush.msra.mxu0 %v2396
        %2471 = vmatpush.msra.mxu0 %v2395
        %2472 = vmatpush.msra.mxu0 %v2394
        %2473 = vmatmul.f32.gmra.mxu0 %v2453
        %v2474 = vpop.f32.mrf.mxu0
        %v2475 = vadd.f32 %v2400, %v2474
        %2476 = vmatmul.f32.gmra.mxu0 %v2455
        %v2477 = vpop.f32.mrf.mxu0
        %v2478 = vadd.f32 %v2400, %v2477
        %2479 = vdwg.mxu0
        %2480 = vst [vmem:[%s402] sm:$0xff] %v2475
        %2481 = vst [vmem:[%s402 + $0x8] sm:$0xff] %v2478
        %s2482 = sand.u32 %s242, 1
        %s2483 = scalar_lea.sflag [#allocation3], %s2482
        %s2484 = sand.u32 %s242, 1
        %s2485 = smul.addr %s2484, 16
        %s2486 = scalar_lea.vmem [#allocation2], %s2485
        %s2487 = smul.u32 16, %s25
        %p2488 = scmp.lt.s32.totalorder %s2487, 31
        %s2489 = scalar_select %p2488, %s2487, 31
        %s2490 = smul.addr %s2489, 8
        %s2491 = scalar_lea.vmem %s10, %s2490
        // Predicated region
        $region57: #{tpu_custom_call.1} parent=55 // pred_check
          %p2492 = pneg %p252
        $region58: #{tpu_custom_call.1} parent=55 // pred_check_branch
          %2494 = sbr.rel (%p2492) target = $region60
        $region59: #{tpu_custom_call.1} parent=55 // pred_region
          %s2495 = smul.u32 2, %s25
          %2497 = vsyncadd %s2483, 0
          %s2498 = smul.addr %s2495, 8
          %s2499 = scalar_lea.hbm %s9, %s2498
          %s2500 = sshll.u32 %s2486, 4
          %s2501 = int_to_ptr.vmem [resolvable:$true] %s2500
          %s2502 = sshll.u32 %s2499, 4
          %s2503 = int_to_ptr.hbm [resolvable:$true] %s2502
          %2508 = dma.vmem_to_hbm [thread:$0]  %s2501, 256, %s2503, %s2483, 128, 128, 8
        $region60: #{tpu_custom_call.1} parent=55 // pred_fallthru
          _
        // Predicated region
        $region61: #{tpu_custom_call.1} parent=55 // pred_check
          %p2509 = pneg %p278
        $region62: #{tpu_custom_call.1} parent=55 // pred_check_branch
          %2511 = sbr.rel (%p2509) target = $region64
        $region63: #{tpu_custom_call.1} parent=55 // pred_region
          %s2512 = smul.u32 16, %s25
        $region64: #{tpu_custom_call.1} parent=55 // pred_fallthru
          _
      $region56: #{tpu_custom_call.1} parent=5 // pred_fallthru
        _
      %p2513 = scmp.le.s32.totalorder 2, %s20
      // Predicated region
      $region65: #{tpu_custom_call.1} parent=5 // pred_check
        %p2514 = pneg %p2513
      $region66: #{tpu_custom_call.1} parent=5 // pred_check_branch
        %2516 = sbr.rel (%p2514) target = $region68
      $region67: #{tpu_custom_call.1} parent=5 // pred_region
        %s2517 = ssub.s32 %s20, 2
        // Predicated region
        $region69: #{tpu_custom_call.1} parent=67 // pred_check
          %p2518 = pneg %p258
        $region70: #{tpu_custom_call.1} parent=67 // pred_check_branch
          %2520 = sbr.rel (%p2518) target = $region72
        $region71: #{tpu_custom_call.1} parent=67 // pred_region
          %s2521 = sand.u32 %s243, 1
          %s2522 = scalar_lea.sflag [#allocation3], %s2521
          %s2523 = sand.u32 %s243, 1
          %s2524 = smul.addr %s2523, 16
          %s2525 = scalar_lea.vmem [#allocation2], %s2524
          %2527 = dma.done %s2522, 256
        $region72: #{tpu_custom_call.1} parent=67 // pred_fallthru
          _
        // Predicated region
        $region73: #{tpu_custom_call.1} parent=67 // pred_check
          %p2528 = pneg %p284
        $region74: #{tpu_custom_call.1} parent=67 // pred_check_branch
          %2530 = sbr.rel (%p2528) target = $region76
        $region75: #{tpu_custom_call.1} parent=67 // pred_region
          %s2531 = smul.u32 16, %s26
          %p2532 = scmp.lt.s32.totalorder %s2531, 31
          %s2533 = scalar_select %p2532, %s2531, 31
          %s2534 = smul.addr %s2533, 8
          %s2535 = scalar_lea.vmem %s10, %s2534
        $region76: #{tpu_custom_call.1} parent=67 // pred_fallthru
          _
      $region68: #{tpu_custom_call.1} parent=5 // pred_fallthru
        _
    $region6: #{tpu_custom_call.1} parent=1 // loop_footer
      %s24 = sadd.s32 1, %s20
    $region7: #{tpu_custom_call.1} parent=1 // loop_footer_branch
      %19 = sbr.rel target = $region3
    $region8: #{tpu_custom_call.1} parent=1 // loop_exit
      _
    %2536 = vsyncpa [#allocation3], 1
    %s2537 = scalar_lea.sflag [#allocation3], 1
    %2538 = vsyncpa %s2537, 1

</llo_original>
